<compile_context>
chip_gen: v7x
topology: tpu7x:2x2x1
jax: 0.10.0
libtpu: 0.0.40
codegen_flags: <defaults>
</compile_context>

<pallas_src>
import math

import jax
import jax.numpy as jnp
from jax import lax
from jax.experimental import pallas as pl
from jax.experimental.pallas import tpu as pltpu


def _make_attention_kernel(N, d, h):
    dk = d // h
    # 1/sqrt(dk) is already folded into the Q weights/bias; the mask penalty
    # just needs the same scale applied once (outside the head loop).
    mask_penalty = 100000.0 / math.sqrt(dk)

    def kernel(x_ref, mrow_ref, mcol_ref, w_ref, b_ref, o_ref, acc_ref):
        # x_ref   : (1, N, d)   one batch, features last (lane-dense)
        # mrow_ref: (1, N, 1)   row mask (0/1)
        # mcol_ref: (1, 1, N)   column mask (0/1)
        # w_ref   : (d, 3d)     packed block-diag weights, per-head [Q|K|V],
        #                       Q columns pre-scaled by 1/sqrt(dk)
        # b_ref   : (1, 3d)     packed biases (bq pre-scaled)
        # acc_ref : (N, d)      VMEM scratch accumulator (head outputs)
        x = x_ref[0]                      # (N, d)
        m_row = mrow_ref[0]               # (N, 1)
        m_col = mcol_ref[0]               # (1, N)

        # One wide matmul for Q, K, V of all heads: (N, 3d).
        qkv = jnp.dot(x, w_ref[...], preferred_element_type=jnp.float32) + b_ref[...]

        # Additive column-mask bias, already scaled by 1/sqrt(dk):
        # 0 where valid, -1e5/sqrt(dk) where masked.  Equals the reference
        # penalty (1 - m_i*m_j)*1e5/sqrt(dk) on every row with m_i = 1;
        # fully-masked rows are zeroed by the final * m_row anyway.
        col_bias = (m_col - 1.0) * mask_penalty        # (1, N)

        for hh in range(h):
            base = hh * 3 * dk                         # contiguous [Q|K|V] chunk
            q = qkv[:, base:base + dk]                 # (N, dk), pre-scaled
            k = qkv[:, base + dk:base + 2 * dk]        # (N, dk)
            v = qkv[:, base + 2 * dk:base + 3 * dk]    # (N, dk)

            # q @ k^T without materializing the transpose; scale is baked in.
            s = lax.dot_general(q, k, (((1,), (1,)), ((), ())),
                                preferred_element_type=jnp.float32)  # (N, N)
            s = s + col_bias
            s = s - jnp.max(s, axis=-1, keepdims=True)
            e = jnp.exp(s)
            inv_den = pl.reciprocal(jnp.sum(e, axis=-1, keepdims=True),
                                    approx=False)      # exact: 1e-4 tolerance
            # Deferred normalization: scale the (N, dk) result, not the
            # (N, N) probabilities.
            o_h = jnp.dot(e, v, preferred_element_type=jnp.float32) * inv_den
            acc_ref[:, hh * dk:(hh + 1) * dk] = o_h    # static lane offset

        # Single lane-dense store; row-mask applied once on the full slab.
        o_ref[0] = (acc_ref[...] * m_row).astype(o_ref.dtype)

    return kernel


def _vmem_limit_bytes(N, d):
    """Working-set estimate (+headroom), clamped to be safe on v5e/v6e/v7x."""
    f32 = 4
    io = 2 * (N * d * f32) * 2                    # x + out, double-buffered
    masks = 2 * (N * 128 * f32 + 8 * max(N, 128) * f32)  # padded masks, x2 buffers
    weights = (d * 3 * d + 3 * d) * f32 * 2       # W + b, double-buffered
    qkv = N * 3 * d * f32                         # fused projection temp
    scores = 3 * N * N * f32                      # s / e / slack (one head live)
    acc = N * d * f32                             # scratch accumulator
    est = int((io + masks + weights + qkv + scores + acc) * 1.5) + (4 << 20)
    # >= 32 MiB (above v5e's 16 MiB default scope), <= 64 MiB (v7x physical).
    return min(max(est, 32 << 20), 64 << 20)


def attention_forward(R, R_mas, params, h):
    """
    R     : (bs, ne, ne, d)   float32
    R_mas : (bs, ne, ne, 1)   float32 (0/1)
    params: dict with WQ/WK/WV weights (dk, dk) and biases (dk,) in PyTorch layout
    returns (bs, ne, ne, d)
    """
    bs, ne, ne2, d = R.shape
    assert ne == ne2
    assert d % h == 0
    dk = d // h
    N = ne * ne
    inv_sqrt_dk = 1.0 / math.sqrt(dk)

    # Layout glue: keep features last (lane-dense). Pure reshapes, no transposes.
    x = R.reshape(bs, N, d).astype(jnp.float32)
    m_flat = R_mas.reshape(bs, N).astype(jnp.float32)
    m_row = m_flat.reshape(bs, N, 1)
    m_col = m_flat.reshape(bs, 1, N)

    # Pack all three projections into one pre-transposed, block-diagonal
    # weight with per-head contiguous [Q_h | K_h | V_h] columns:
    #   y = x @ W_packed + b_packed,  y[:, 3*dk*h0 : 3*dk*(h0+1)] = [Q|K|V]_h0
    # The 1/sqrt(dk) softmax scale is folded into the Q columns and bq.
    wq_t = params["wq"].T.astype(jnp.float32) * inv_sqrt_dk
    wk_t = params["wk"].T.astype(jnp.float32)
    wv_t = params["wv"].T.astype(jnp.float32)
    w_head = jnp.concatenate([wq_t, wk_t, wv_t], axis=1)           # (dk, 3dk)
    W_packed = jnp.kron(jnp.eye(h, dtype=jnp.float32), w_head)     # (d, 3d)

    b_head = jnp.concatenate([params["bq"].astype(jnp.float32) * inv_sqrt_dk,
                              params["bk"].astype(jnp.float32),
                              params["bv"].astype(jnp.float32)])   # (3dk,)
    b_packed = jnp.tile(b_head, h).reshape(1, 3 * d)                # (1, 3d)

    kernel = _make_attention_kernel(N, d, h)

    out = pl.pallas_call(
        kernel,
        out_shape=jax.ShapeDtypeStruct((bs, N, d), jnp.float32),
        grid_spec=pltpu.PrefetchScalarGridSpec(
            num_scalar_prefetch=0,
            grid=(bs,),
            in_specs=[
                pl.BlockSpec((1, N, d), lambda b: (b, 0, 0)),      # x
                pl.BlockSpec((1, N, 1), lambda b: (b, 0, 0)),      # row mask
                pl.BlockSpec((1, 1, N), lambda b: (b, 0, 0)),      # col mask
                pl.BlockSpec((d, 3 * d), lambda b: (0, 0)),        # packed W
                pl.BlockSpec((1, 3 * d), lambda b: (0, 0)),        # packed b
            ],
            out_specs=pl.BlockSpec((1, N, d), lambda b: (b, 0, 0)),
            scratch_shapes=[pltpu.VMEM((N, d), jnp.float32)],      # head accumulator
        ),
        compiler_params=pltpu.CompilerParams(
            dimension_semantics=("parallel",),
            vmem_limit_bytes=_vmem_limit_bytes(N, d)),
    )(x, m_row, m_col, W_packed, b_packed)

    # Output rows are already (i, j)-flattened with head-major features,
    # exactly matching PyTorch's final .permute(0,2,3,1,4).view(bs,ne,ne,h*dk).
    return out.reshape(bs, ne, ne, d)


def attention_reference(R, R_mas, params, h):
    """Pure-JAX reference reproducing the PyTorch forward exactly."""
    bs, ne, _, d = R.shape
    dk = d // h
    N = ne * ne
    Rp = R.reshape(bs, ne, ne, h, dk).transpose(0, 3, 1, 2, 4)     # (bs,h,ne,ne,dk)
    X = Rp.reshape(bs, h, N, dk)
    Q = X @ params["wq"].T + params["bq"]
    K = X @ params["wk"].T + params["bk"]
    V = X @ params["wv"].T + params["bv"]
    mas = R_mas.reshape(bs, 1, N, 1)
    att_mas = mas * mas.reshape(bs, 1, 1, N)
    alpha = jnp.einsum("bhnd,bhmd->bhnm", Q, K)
    alpha = alpha - (1.0 - att_mas) * 100000.0
    alpha = jax.nn.softmax(alpha / math.sqrt(dk), axis=-1)
    R_Z = jnp.einsum("bhnm,bhmd->bhnd", alpha, V).reshape(bs, h, ne, ne, dk)
    R_Z = R_Z * R_mas.reshape(bs, 1, ne, ne, 1)
    return R_Z.transpose(0, 2, 3, 1, 4).reshape(bs, ne, ne, h * dk)


if __name__ == "__main__":
    # Small shapes consistent with the module: d_model divisible by h.
    bs, ne, h, d_model = 2, 4, 4, 32
    dk = d_model // h

    key = jax.random.PRNGKey(0)
    k_r, k_m, k_wq, k_wk, k_wv, k_bq, k_bk, k_bv = jax.random.split(key, 8)

    R = jax.random.normal(k_r, (bs, ne, ne, d_model), dtype=jnp.float32)
    R_mas = (jax.random.uniform(k_m, (bs, ne, ne, 1)) > 0.3).astype(jnp.float32)

    # deterministic xavier-normal-like init for the dk x dk projections
    xavier_std = math.sqrt(2.0 / (dk + dk))
    params = {
        "wq": xavier_std * jax.random.normal(k_wq, (dk, dk), dtype=jnp.float32),
        "wk": xavier_std * jax.random.normal(k_wk, (dk, dk), dtype=jnp.float32),
        "wv": xavier_std * jax.random.normal(k_wv, (dk, dk), dtype=jnp.float32),
        "bq": 0.1 * jax.random.normal(k_bq, (dk,), dtype=jnp.float32),
        "bk": 0.1 * jax.random.normal(k_bk, (dk,), dtype=jnp.float32),
        "bv": 0.1 * jax.random.normal(k_bv, (dk,), dtype=jnp.float32),
    }

    out = attention_forward(R, R_mas, params, h)
    out = jax.block_until_ready(out)

    ref = attention_reference(R, R_mas, params, h)
    assert out.shape == (bs, ne, ne, d_model)
    assert jnp.allclose(out, ref, atol=1e-4, rtol=1e-4), "mismatch vs reference"

    print("KERNEL_OK")
</pallas_src>

<mosaic_0001>
module attributes {stable_mosaic.version = 11 : i64} {
  func.func @kernel(%arg0: i32, %arg1: memref<1x16x32xf32, #tpu.memory_space<vmem>>, %arg2: memref<1x16x1xf32, #tpu.memory_space<vmem>>, %arg3: memref<1x1x16xf32, #tpu.memory_space<vmem>>, %arg4: memref<32x96xf32, #tpu.memory_space<vmem>>, %arg5: memref<1x96xf32, #tpu.memory_space<vmem>>, %arg6: memref<1x16x32xf32, #tpu.memory_space<vmem>>, %arg7: memref<16x32xf32, #tpu.memory_space<vmem>>) attributes {dimension_semantics = [#tpu.dimension_semantics<parallel>], iteration_bounds = array<i64: 2>, scalar_prefetch = 0 : i64, scratch_operands = 1 : i64, tpu.core_type = #tpu.core_type<tc>, window_params = [{transform_indices = @transform_0, window_bounds = array<i64: 1, 16, 32>}, {transform_indices = @transform_1, window_bounds = array<i64: 1, 16, 1>}, {transform_indices = @transform_2, window_bounds = array<i64: 1, 1, 16>}, {pipeline_mode = #tpu.pipeline_mode<synchronous>, transform_indices = @transform_3, window_bounds = array<i64: 32, 96>}, {pipeline_mode = #tpu.pipeline_mode<synchronous>, transform_indices = @transform_4, window_bounds = array<i64: 1, 96>}, {transform_indices = @transform_5, window_bounds = array<i64: 1, 16, 32>}]} {
    %c0 = arith.constant 0 : index
    %c0_0 = arith.constant 0 : index
    %c0_1 = arith.constant 0 : index
    %0 = vector.load %arg1[%c0, %c0_0, %c0_1] : memref<1x16x32xf32, #tpu.memory_space<vmem>>, vector<1x16x32xf32>
    %1 = vector.shape_cast %0 : vector<1x16x32xf32> to vector<16x32xf32>
    %c0_2 = arith.constant 0 : index
    %c0_3 = arith.constant 0 : index
    %c0_4 = arith.constant 0 : index
    %2 = vector.load %arg2[%c0_2, %c0_3, %c0_4] : memref<1x16x1xf32, #tpu.memory_space<vmem>>, vector<1x16x1xf32>
    %3 = vector.shape_cast %2 : vector<1x16x1xf32> to vector<16x1xf32>
    %c0_5 = arith.constant 0 : index
    %c0_6 = arith.constant 0 : index
    %c0_7 = arith.constant 0 : index
    %4 = vector.load %arg3[%c0_5, %c0_6, %c0_7] : memref<1x1x16xf32, #tpu.memory_space<vmem>>, vector<1x1x16xf32>
    %5 = vector.shape_cast %4 : vector<1x1x16xf32> to vector<1x16xf32>
    %c0_8 = arith.constant 0 : index
    %c0_9 = arith.constant 0 : index
    %6 = vector.load %arg4[%c0_8, %c0_9] : memref<32x96xf32, #tpu.memory_space<vmem>>, vector<32x96xf32>
    %cst = arith.constant dense<0.000000e+00> : vector<16x96xf32>
    %7 = tpu.matmul %1, %6, %cst {dimension_numbers = #tpu.dot_dimension_numbers<[1], [0], [0], [1], [0, 0, 1, 1], [], []>} : vector<16x32xf32>, vector<32x96xf32>, vector<16x96xf32> -> vector<16x96xf32>
    %c0_10 = arith.constant 0 : index
    %c0_11 = arith.constant 0 : index
    %8 = vector.load %arg5[%c0_10, %c0_11] : memref<1x96xf32, #tpu.memory_space<vmem>>, vector<1x96xf32>
    %9 = vector.broadcast %8 : vector<1x96xf32> to vector<16x96xf32>
    %10 = arith.addf %7, %9 : vector<16x96xf32>
    %cst_12 = arith.constant 1.000000e+00 : f32
    %11 = vector.broadcast %cst_12 : f32 to vector<1x16xf32>
    %12 = arith.subf %5, %11 : vector<1x16xf32>
    %cst_13 = arith.constant 35355.3398 : f32
    %13 = vector.broadcast %cst_13 : f32 to vector<1x16xf32>
    %14 = arith.mulf %12, %13 : vector<1x16xf32>
    %15 = vector.extract_strided_slice %10 {offsets = [0, 0], sizes = [16, 8], strides = [1, 1]} : vector<16x96xf32> to vector<16x8xf32>
    %16 = vector.extract_strided_slice %10 {offsets = [0, 8], sizes = [16, 8], strides = [1, 1]} : vector<16x96xf32> to vector<16x8xf32>
    %17 = vector.extract_strided_slice %10 {offsets = [0, 16], sizes = [16, 8], strides = [1, 1]} : vector<16x96xf32> to vector<16x8xf32>
    %cst_14 = arith.constant dense<0.000000e+00> : vector<16x16xf32>
    %18 = tpu.matmul %15, %16, %cst_14 {dimension_numbers = #tpu.dot_dimension_numbers<[1], [1], [0], [0], [0, 0, 1, 0], [], []>} : vector<16x8xf32>, vector<16x8xf32>, vector<16x16xf32> -> vector<16x16xf32>
    %19 = vector.broadcast %14 : vector<1x16xf32> to vector<16x16xf32>
    %20 = arith.addf %18, %19 : vector<16x16xf32>
    %cst_15 = arith.constant dense<0xFF800000> : vector<16xf32>
    %21 = vector.multi_reduction <maximumf>, %20, %cst_15 [1] : vector<16x16xf32> to vector<16xf32>
    %22 = vector.shape_cast %21 : vector<16xf32> to vector<16x1xf32>
    %23 = vector.broadcast %22 : vector<16x1xf32> to vector<16x16xf32>
    %24 = arith.subf %20, %23 : vector<16x16xf32>
    %25 = math.exp %24 : vector<16x16xf32>
    %cst_16 = arith.constant dense<0.000000e+00> : vector<16xf32>
    %26 = vector.multi_reduction <add>, %25, %cst_16 [1] : vector<16x16xf32> to vector<16xf32>
    %27 = vector.shape_cast %26 : vector<16xf32> to vector<16x1xf32>
    %28 = tpu.reciprocal %27 : vector<16x1xf32> -> vector<16x1xf32>
    %cst_17 = arith.constant dense<0.000000e+00> : vector<16x8xf32>
    %29 = tpu.matmul %25, %17, %cst_17 {dimension_numbers = #tpu.dot_dimension_numbers<[1], [0], [0], [1], [0, 0, 1, 1], [], []>} : vector<16x16xf32>, vector<16x8xf32>, vector<16x8xf32> -> vector<16x8xf32>
    %30 = vector.broadcast %28 : vector<16x1xf32> to vector<16x8xf32>
    %31 = arith.mulf %29, %30 : vector<16x8xf32>
    %c0_18 = arith.constant 0 : index
    %c0_19 = arith.constant 0 : index
    %32 = vector.load %arg7[%c0_18, %c0_19] : memref<16x32xf32, #tpu.memory_space<vmem>>, vector<16x8xf32>
    tpu.vector_store %arg7[%c0_18, %c0_19], %31 {strides = array<i32>} : memref<16x32xf32, #tpu.memory_space<vmem>>, vector<16x8xf32>,
    %33 = vector.extract_strided_slice %10 {offsets = [0, 24], sizes = [16, 8], strides = [1, 1]} : vector<16x96xf32> to vector<16x8xf32>
    %34 = vector.extract_strided_slice %10 {offsets = [0, 32], sizes = [16, 8], strides = [1, 1]} : vector<16x96xf32> to vector<16x8xf32>
    %35 = vector.extract_strided_slice %10 {offsets = [0, 40], sizes = [16, 8], strides = [1, 1]} : vector<16x96xf32> to vector<16x8xf32>
    %cst_20 = arith.constant dense<0.000000e+00> : vector<16x16xf32>
    %36 = tpu.matmul %33, %34, %cst_20 {dimension_numbers = #tpu.dot_dimension_numbers<[1], [1], [0], [0], [0, 0, 1, 0], [], []>} : vector<16x8xf32>, vector<16x8xf32>, vector<16x16xf32> -> vector<16x16xf32>
    %37 = vector.broadcast %14 : vector<1x16xf32> to vector<16x16xf32>
    %38 = arith.addf %36, %37 : vector<16x16xf32>
    %cst_21 = arith.constant dense<0xFF800000> : vector<16xf32>
    %39 = vector.multi_reduction <maximumf>, %38, %cst_21 [1] : vector<16x16xf32> to vector<16xf32>
    %40 = vector.shape_cast %39 : vector<16xf32> to vector<16x1xf32>
    %41 = vector.broadcast %40 : vector<16x1xf32> to vector<16x16xf32>
    %42 = arith.subf %38, %41 : vector<16x16xf32>
    %43 = math.exp %42 : vector<16x16xf32>
    %cst_22 = arith.constant dense<0.000000e+00> : vector<16xf32>
    %44 = vector.multi_reduction <add>, %43, %cst_22 [1] : vector<16x16xf32> to vector<16xf32>
    %45 = vector.shape_cast %44 : vector<16xf32> to vector<16x1xf32>
    %46 = tpu.reciprocal %45 : vector<16x1xf32> -> vector<16x1xf32>
    %cst_23 = arith.constant dense<0.000000e+00> : vector<16x8xf32>
    %47 = tpu.matmul %43, %35, %cst_23 {dimension_numbers = #tpu.dot_dimension_numbers<[1], [0], [0], [1], [0, 0, 1, 1], [], []>} : vector<16x16xf32>, vector<16x8xf32>, vector<16x8xf32> -> vector<16x8xf32>
    %48 = vector.broadcast %46 : vector<16x1xf32> to vector<16x8xf32>
    %49 = arith.mulf %47, %48 : vector<16x8xf32>
    %c0_24 = arith.constant 0 : index
    %c8 = arith.constant 8 : index
    %50 = vector.load %arg7[%c0_24, %c8] : memref<16x32xf32, #tpu.memory_space<vmem>>, vector<16x8xf32>
    tpu.vector_store %arg7[%c0_24, %c8], %49 {strides = array<i32>} : memref<16x32xf32, #tpu.memory_space<vmem>>, vector<16x8xf32>,
    %51 = vector.extract_strided_slice %10 {offsets = [0, 48], sizes = [16, 8], strides = [1, 1]} : vector<16x96xf32> to vector<16x8xf32>
    %52 = vector.extract_strided_slice %10 {offsets = [0, 56], sizes = [16, 8], strides = [1, 1]} : vector<16x96xf32> to vector<16x8xf32>
    %53 = vector.extract_strided_slice %10 {offsets = [0, 64], sizes = [16, 8], strides = [1, 1]} : vector<16x96xf32> to vector<16x8xf32>
    %cst_25 = arith.constant dense<0.000000e+00> : vector<16x16xf32>
    %54 = tpu.matmul %51, %52, %cst_25 {dimension_numbers = #tpu.dot_dimension_numbers<[1], [1], [0], [0], [0, 0, 1, 0], [], []>} : vector<16x8xf32>, vector<16x8xf32>, vector<16x16xf32> -> vector<16x16xf32>
    %55 = vector.broadcast %14 : vector<1x16xf32> to vector<16x16xf32>
    %56 = arith.addf %54, %55 : vector<16x16xf32>
    %cst_26 = arith.constant dense<0xFF800000> : vector<16xf32>
    %57 = vector.multi_reduction <maximumf>, %56, %cst_26 [1] : vector<16x16xf32> to vector<16xf32>
    %58 = vector.shape_cast %57 : vector<16xf32> to vector<16x1xf32>
    %59 = vector.broadcast %58 : vector<16x1xf32> to vector<16x16xf32>
    %60 = arith.subf %56, %59 : vector<16x16xf32>
    %61 = math.exp %60 : vector<16x16xf32>
    %cst_27 = arith.constant dense<0.000000e+00> : vector<16xf32>
    %62 = vector.multi_reduction <add>, %61, %cst_27 [1] : vector<16x16xf32> to vector<16xf32>
    %63 = vector.shape_cast %62 : vector<16xf32> to vector<16x1xf32>
    %64 = tpu.reciprocal %63 : vector<16x1xf32> -> vector<16x1xf32>
    %cst_28 = arith.constant dense<0.000000e+00> : vector<16x8xf32>
    %65 = tpu.matmul %61, %53, %cst_28 {dimension_numbers = #tpu.dot_dimension_numbers<[1], [0], [0], [1], [0, 0, 1, 1], [], []>} : vector<16x16xf32>, vector<16x8xf32>, vector<16x8xf32> -> vector<16x8xf32>
    %66 = vector.broadcast %64 : vector<16x1xf32> to vector<16x8xf32>
    %67 = arith.mulf %65, %66 : vector<16x8xf32>
    %c0_29 = arith.constant 0 : index
    %c16 = arith.constant 16 : index
    %68 = vector.load %arg7[%c0_29, %c16] : memref<16x32xf32, #tpu.memory_space<vmem>>, vector<16x8xf32>
    tpu.vector_store %arg7[%c0_29, %c16], %67 {strides = array<i32>} : memref<16x32xf32, #tpu.memory_space<vmem>>, vector<16x8xf32>,
    %69 = vector.extract_strided_slice %10 {offsets = [0, 72], sizes = [16, 8], strides = [1, 1]} : vector<16x96xf32> to vector<16x8xf32>
    %70 = vector.extract_strided_slice %10 {offsets = [0, 80], sizes = [16, 8], strides = [1, 1]} : vector<16x96xf32> to vector<16x8xf32>
    %71 = vector.extract_strided_slice %10 {offsets = [0, 88], sizes = [16, 8], strides = [1, 1]} : vector<16x96xf32> to vector<16x8xf32>
    %cst_30 = arith.constant dense<0.000000e+00> : vector<16x16xf32>
    %72 = tpu.matmul %69, %70, %cst_30 {dimension_numbers = #tpu.dot_dimension_numbers<[1], [1], [0], [0], [0, 0, 1, 0], [], []>} : vector<16x8xf32>, vector<16x8xf32>, vector<16x16xf32> -> vector<16x16xf32>
    %73 = vector.broadcast %14 : vector<1x16xf32> to vector<16x16xf32>
    %74 = arith.addf %72, %73 : vector<16x16xf32>
    %cst_31 = arith.constant dense<0xFF800000> : vector<16xf32>
    %75 = vector.multi_reduction <maximumf>, %74, %cst_31 [1] : vector<16x16xf32> to vector<16xf32>
    %76 = vector.shape_cast %75 : vector<16xf32> to vector<16x1xf32>
    %77 = vector.broadcast %76 : vector<16x1xf32> to vector<16x16xf32>
    %78 = arith.subf %74, %77 : vector<16x16xf32>
    %79 = math.exp %78 : vector<16x16xf32>
    %cst_32 = arith.constant dense<0.000000e+00> : vector<16xf32>
    %80 = vector.multi_reduction <add>, %79, %cst_32 [1] : vector<16x16xf32> to vector<16xf32>
    %81 = vector.shape_cast %80 : vector<16xf32> to vector<16x1xf32>
    %82 = tpu.reciprocal %81 : vector<16x1xf32> -> vector<16x1xf32>
    %cst_33 = arith.constant dense<0.000000e+00> : vector<16x8xf32>
    %83 = tpu.matmul %79, %71, %cst_33 {dimension_numbers = #tpu.dot_dimension_numbers<[1], [0], [0], [1], [0, 0, 1, 1], [], []>} : vector<16x16xf32>, vector<16x8xf32>, vector<16x8xf32> -> vector<16x8xf32>
    %84 = vector.broadcast %82 : vector<16x1xf32> to vector<16x8xf32>
    %85 = arith.mulf %83, %84 : vector<16x8xf32>
    %c0_34 = arith.constant 0 : index
    %c24 = arith.constant 24 : index
    %86 = vector.load %arg7[%c0_34, %c24] : memref<16x32xf32, #tpu.memory_space<vmem>>, vector<16x8xf32>
    tpu.vector_store %arg7[%c0_34, %c24], %85 {strides = array<i32>} : memref<16x32xf32, #tpu.memory_space<vmem>>, vector<16x8xf32>,
    %c0_35 = arith.constant 0 : index
    %c0_36 = arith.constant 0 : index
    %87 = vector.load %arg7[%c0_35, %c0_36] : memref<16x32xf32, #tpu.memory_space<vmem>>, vector<16x32xf32>
    %88 = vector.broadcast %3 : vector<16x1xf32> to vector<16x32xf32>
    %89 = arith.mulf %87, %88 : vector<16x32xf32>
    %c0_37 = arith.constant 0 : index
    %c0_38 = arith.constant 0 : index
    %c0_39 = arith.constant 0 : index
    %90 = vector.load %arg6[%c0_37, %c0_38, %c0_39] : memref<1x16x32xf32, #tpu.memory_space<vmem>>, vector<1x16x32xf32>
    %91 = vector.shape_cast %90 : vector<1x16x32xf32> to vector<16x32xf32>
    %92 = vector.shape_cast %89 : vector<16x32xf32> to vector<1x16x32xf32>
    tpu.vector_store %arg6[%c0_37, %c0_38, %c0_39], %92 {strides = array<i32>} : memref<1x16x32xf32, #tpu.memory_space<vmem>>, vector<1x16x32xf32>,
    return
  }
  func.func @transform_0(%arg0: i32) -> (i32, i32, i32) {
    %c0_i32 = arith.constant 0 : i32
    %c0_i32_0 = arith.constant 0 : i32
    %c0_i32_1 = arith.constant 0 : i32
    return %arg0, %c0_i32, %c0_i32_0 : i32, i32, i32
  }
  func.func @transform_1(%arg0: i32) -> (i32, i32, i32) {
    %c0_i32 = arith.constant 0 : i32
    %c0_i32_0 = arith.constant 0 : i32
    %c0_i32_1 = arith.constant 0 : i32
    return %arg0, %c0_i32, %c0_i32_0 : i32, i32, i32
  }
  func.func @transform_2(%arg0: i32) -> (i32, i32, i32) {
    %c0_i32 = arith.constant 0 : i32
    %c0_i32_0 = arith.constant 0 : i32
    %c0_i32_1 = arith.constant 0 : i32
    return %arg0, %c0_i32, %c0_i32_0 : i32, i32, i32
  }
  func.func @transform_3(%arg0: i32) -> (i32, i32) {
    %c0_i32 = arith.constant 0 : i32
    %c0_i32_0 = arith.constant 0 : i32
    %c0_i32_1 = arith.constant 0 : i32
    return %c0_i32, %c0_i32_0 : i32, i32
  }
  func.func @transform_4(%arg0: i32) -> (i32, i32) {
    %c0_i32 = arith.constant 0 : i32
    %c0_i32_0 = arith.constant 0 : i32
    %c0_i32_1 = arith.constant 0 : i32
    return %c0_i32, %c0_i32_0 : i32, i32
  }
  func.func @transform_5(%arg0: i32) -> (i32, i32, i32) {
    %c0_i32 = arith.constant 0 : i32
    %c0_i32_0 = arith.constant 0 : i32
    %c0_i32_1 = arith.constant 0 : i32
    return %arg0, %c0_i32, %c0_i32_0 : i32, i32, i32
  }
}

</mosaic_0001>

<llo_original>
// kernel: tpu_custom_call.1
$region0: #{tpu_custom_call.1}
  #allocation0 [shape = 'u32[]', space=smem, size = 0x4, offset = 0x4, fixed_abs, tag = 'smem constant byte address 0x4 - core index']
  #allocation1 [shape = 'u32[144,128]{1,0:T(1,128)}', space=vmem, size = 0x12000, scoped, tag = 'internal scratch']
  #allocation2 [shape = 'f32[16,32]{1,0:T(8,128)}', space=vmem, size = 0x2000, scoped, tag = 'scratch operand']
  %s0 = inlined_call_operand.vmem [shape: f32[2,16,32], index: 0, kind: input, shape index: {}]
  %s1 = inlined_call_operand.vmem [shape: f32[2,16,1], index: 1, kind: input, shape index: {}]
  %s2 = inlined_call_operand.vmem [shape: f32[2,1,16], index: 2, kind: input, shape index: {}]
  %s3 = inlined_call_operand.hbm [shape: f32[32,96], index: 3, kind: input, shape index: {}]
  %s4 = inlined_call_operand.vmem [shape: f32[1,96], index: 4, kind: input, shape index: {}]
  %s5 = inlined_call_operand.hbm [shape: f32[2,16,32], index: 5, kind: output, shape index: {}]
  %s6 = sld [smem:[#allocation0]]
  $region57: #{tpu_custom_call.1} parent=0
    _
  %s8 = ssub.s32 1, %s6
  %s9 = scalar_select 0, %s8, %s6
  $region1: #{tpu_custom_call.1} parent=0
    #allocation3 [shape = 'u8[16384]{0}', space=vmem, size = 0x4000, scoped, tag = 'input window, operand 3, single buffered']
    #allocation4 [shape = 's32[2]{0}', space=sflag, size = 0x8, scoped, tag = 'scoped memory for tpu_custom_call.1']
    #allocation5 [shape = 's32[2]{0}', space=sflag, size = 0x8, scoped, tag = 'scoped memory for tpu_custom_call.1']
    #allocation6 [shape = 'u8[16384]{0}', space=vmem, size = 0x4000, scoped, tag = 'output window, operand 0']
    %10 = vsyncpa [#allocation4], 0
    %11 = vsyncpa [#allocation5], 0
    %s12 = scalar_lea.sflag [#allocation5], 1
    %13 = vsyncpa %s12, 0
    loop: start=0, step=1, limit=4
    $region2: #{tpu_custom_call.1} parent=1 // loop_pre_header
      _
    $region3: #{tpu_custom_call.1} parent=1 // loop_header
      %s15 = sphi 0, %s19
      %p16 = scmp.ge.s32.totalorder %s15, 4
      %s25 = sphi 0, %s27
      %s28 = sphi 0, %s25
      %s29 = sphi 0, %s28
      %s45 = sphi 0, %s29
      %s51 = sphi 0, %s53
      %s54 = sphi 0, %s51
      %s55 = sphi 0, %s54
      %s71 = sphi 0, %s55
      %s77 = sphi 0, %s79
      %s80 = sphi 0, %s77
      %s81 = sphi 0, %s80
      %s97 = sphi 0, %s81
      %s101 = sphi 0, %s101
      %s103 = sphi 0, %s101
      %s104 = sphi 0, %s103
      %s118 = sphi 0, %s104
      %s122 = sphi 0, %s122
      %s124 = sphi 0, %s122
      %s125 = sphi 0, %s124
      %s139 = sphi 0, %s125
      %s145 = sphi 0, %s147
      %s148 = sphi 0, %s145
      %s149 = sphi 0, %s148
      %s165 = sphi 0, %s149
    $region4: #{tpu_custom_call.1} parent=1 // loop_header_branch
      %18 = sbr.rel (%p16) target = $region8
    $region5: #{tpu_custom_call.1} parent=1 // loop_body
      %s20 = ssub.s32 %s15, 1
      %s21 = ssub.s32 %s15, 2
      %s22 = sadd.s32 %s15, 1
      %s23 = ssub.s32 %s15, %s22
      %p24 = scmp.eq.s32.totalorder %s23, 0
      %s26 = sadd.s32 %s25, 1
      %s27 = scalar_select %p24, %s25, %s26
      %p30 = pneg %p24
      %p31 = scmp.eq.s32.totalorder %s15, 1
      %p32 = por %p30, %p31
      %p33 = scmp.ne.s32.totalorder %s25, %s28
      %p34 = scmp.eq.s32.totalorder %s15, 0
      %p35 = por %p33, %p34
      %p36 = scmp.ne.s32.totalorder %s25, %s28
      %p37 = scmp.eq.s32.totalorder %s20, 1
      %p38 = por %p36, %p37
      %p39 = scmp.ne.s32.totalorder %s28, %s29
      %p40 = scmp.eq.s32.totalorder %s20, 0
      %p41 = por %p39, %p40
      %p42 = scmp.ne.s32.totalorder %s28, %s29
      %p43 = scmp.eq.s32.totalorder %s21, 1
      %p44 = por %p42, %p43
      %p46 = scmp.ne.s32.totalorder %s29, %s45
      %p47 = scmp.eq.s32.totalorder %s21, 0
      %p48 = por %p46, %p47
      %s49 = ssub.s32 %s15, %s22
      %p50 = scmp.eq.s32.totalorder %s49, 0
      %s52 = sadd.s32 %s51, 1
      %s53 = scalar_select %p50, %s51, %s52
      %p56 = pneg %p50
      %p57 = scmp.eq.s32.totalorder %s15, 1
      %p58 = por %p56, %p57
      %p59 = scmp.ne.s32.totalorder %s51, %s54
      %p60 = scmp.eq.s32.totalorder %s15, 0
      %p61 = por %p59, %p60
      %p62 = scmp.ne.s32.totalorder %s51, %s54
      %p63 = scmp.eq.s32.totalorder %s20, 1
      %p64 = por %p62, %p63
      %p65 = scmp.ne.s32.totalorder %s54, %s55
      %p66 = scmp.eq.s32.totalorder %s20, 0
      %p67 = por %p65, %p66
      %p68 = scmp.ne.s32.totalorder %s54, %s55
      %p69 = scmp.eq.s32.totalorder %s21, 1
      %p70 = por %p68, %p69
      %p72 = scmp.ne.s32.totalorder %s55, %s71
      %p73 = scmp.eq.s32.totalorder %s21, 0
      %p74 = por %p72, %p73
      %s75 = ssub.s32 %s15, %s22
      %p76 = scmp.eq.s32.totalorder %s75, 0
      %s78 = sadd.s32 %s77, 1
      %s79 = scalar_select %p76, %s77, %s78
      %p82 = pneg %p76
      %p83 = scmp.eq.s32.totalorder %s15, 1
      %p84 = por %p82, %p83
      %p85 = scmp.ne.s32.totalorder %s77, %s80
      %p86 = scmp.eq.s32.totalorder %s15, 0
      %p87 = por %p85, %p86
      %p88 = scmp.ne.s32.totalorder %s77, %s80
      %p89 = scmp.eq.s32.totalorder %s20, 1
      %p90 = por %p88, %p89
      %p91 = scmp.ne.s32.totalorder %s80, %s81
      %p92 = scmp.eq.s32.totalorder %s20, 0
      %p93 = por %p91, %p92
      %p94 = scmp.ne.s32.totalorder %s80, %s81
      %p95 = scmp.eq.s32.totalorder %s21, 1
      %p96 = por %p94, %p95
      %p98 = scmp.ne.s32.totalorder %s81, %s97
      %p99 = scmp.eq.s32.totalorder %s21, 0
      %p100 = por %p98, %p99
      %s102 = sadd.s32 %s101, 1
      %p105 = scmp.eq.s32.totalorder %s15, 1
      %p106 = scmp.ne.s32.totalorder %s101, %s103
      %p107 = scmp.eq.s32.totalorder %s15, 0
      %p108 = por %p106, %p107
      %p109 = scmp.ne.s32.totalorder %s101, %s103
      %p110 = scmp.eq.s32.totalorder %s20, 1
      %p111 = por %p109, %p110
      %p112 = scmp.ne.s32.totalorder %s103, %s104
      %p113 = scmp.eq.s32.totalorder %s20, 0
      %p114 = por %p112, %p113
      %p115 = scmp.ne.s32.totalorder %s103, %s104
      %p116 = scmp.eq.s32.totalorder %s21, 1
      %p117 = por %p115, %p116
      %p119 = scmp.ne.s32.totalorder %s104, %s118
      %p120 = scmp.eq.s32.totalorder %s21, 0
      %p121 = por %p119, %p120
      %s123 = sadd.s32 %s122, 1
      %p126 = scmp.eq.s32.totalorder %s15, 1
      %p127 = scmp.ne.s32.totalorder %s122, %s124
      %p128 = scmp.eq.s32.totalorder %s15, 0
      %p129 = por %p127, %p128
      %p130 = scmp.ne.s32.totalorder %s122, %s124
      %p131 = scmp.eq.s32.totalorder %s20, 1
      %p132 = por %p130, %p131
      %p133 = scmp.ne.s32.totalorder %s124, %s125
      %p134 = scmp.eq.s32.totalorder %s20, 0
      %p135 = por %p133, %p134
      %p136 = scmp.ne.s32.totalorder %s124, %s125
      %p137 = scmp.eq.s32.totalorder %s21, 1
      %p138 = por %p136, %p137
      %p140 = scmp.ne.s32.totalorder %s125, %s139
      %p141 = scmp.eq.s32.totalorder %s21, 0
      %p142 = por %p140, %p141
      %s143 = ssub.s32 %s15, %s22
      %p144 = scmp.eq.s32.totalorder %s143, 0
      %s146 = sadd.s32 %s145, 1
      %s147 = scalar_select %p144, %s145, %s146
      %p150 = pneg %p144
      %p151 = scmp.eq.s32.totalorder %s15, 1
      %p152 = por %p150, %p151
      %p153 = scmp.ne.s32.totalorder %s145, %s148
      %p154 = scmp.eq.s32.totalorder %s15, 0
      %p155 = por %p153, %p154
      %p156 = scmp.ne.s32.totalorder %s145, %s148
      %p157 = scmp.eq.s32.totalorder %s20, 1
      %p158 = por %p156, %p157
      %p159 = scmp.ne.s32.totalorder %s148, %s149
      %p160 = scmp.eq.s32.totalorder %s20, 0
      %p161 = por %p159, %p160
      %p162 = scmp.ne.s32.totalorder %s148, %s149
      %p163 = scmp.eq.s32.totalorder %s21, 1
      %p164 = por %p162, %p163
      %p166 = scmp.ne.s32.totalorder %s149, %s165
      %p167 = scmp.eq.s32.totalorder %s21, 0
      %p168 = por %p166, %p167
      %p169 = scmp.le.s32.totalorder 1, %s15
      %p170 = scmp.lt.s32.totalorder %s15, 3
      %p171 = pnand %p169, %p170
      %p172 = pneg %p171
      // Predicated region
      $region9: #{tpu_custom_call.1} parent=5 // pred_check
        _
      $region10: #{tpu_custom_call.1} parent=5 // pred_check_branch
        %174 = sbr.rel (%p171) target = $region12
      $region11: #{tpu_custom_call.1} parent=5 // pred_region
        %s175 = ssub.s32 %s15, 1
        // Predicated region
        $region13: #{tpu_custom_call.1} parent=11 // pred_check
          %p176 = pneg %p114
        $region14: #{tpu_custom_call.1} parent=11 // pred_check_branch
          %178 = sbr.rel (%p176) target = $region16
        $region15: #{tpu_custom_call.1} parent=11 // pred_region
          %s180 = ssub.s32 512, 512
          %181 = vsyncadd [#allocation4], %s180
          %s182 = sshll.u32 [#allocation3], 4
          %s183 = int_to_ptr.vmem [resolvable:$true] %s182
          %188 = dma.hbm_to_vmem [thread:$0]  %s3, 512, %s183, [#allocation4], 128, 128, 8
        $region16: #{tpu_custom_call.1} parent=11 // pred_fallthru
          _
        // Predicated region
        $region17: #{tpu_custom_call.1} parent=11 // pred_check
          %p189 = pneg %p135
        $region18: #{tpu_custom_call.1} parent=11 // pred_check_branch
          %191 = sbr.rel (%p189) target = $region20
        $region19: #{tpu_custom_call.1} parent=11 // pred_region
          _
        $region20: #{tpu_custom_call.1} parent=11 // pred_fallthru
          _
      $region12: #{tpu_custom_call.1} parent=5 // pred_fallthru
        _
      %p192 = scmp.lt.s32.totalorder %s15, 2
      // Predicated region
      $region21: #{tpu_custom_call.1} parent=5 // pred_check
        %p193 = pneg %p192
      $region22: #{tpu_custom_call.1} parent=5 // pred_check_branch
        %195 = sbr.rel (%p193) target = $region24
      $region23: #{tpu_custom_call.1} parent=5 // pred_region
        // Predicated region
        $region25: #{tpu_custom_call.1} parent=23 // pred_check
          %p196 = pneg %p35
        $region26: #{tpu_custom_call.1} parent=23 // pred_check_branch
          %198 = sbr.rel (%p196) target = $region28
        $region27: #{tpu_custom_call.1} parent=23 // pred_region
          %p199 = scmp.lt.s32.totalorder %s15, 1
          %s200 = scalar_select %p199, %s15, 1
          %s201 = smul.addr %s200, 2
          %s202 = smul.addr %s201, 8
          %s203 = scalar_lea.vmem %s0, %s202
        $region28: #{tpu_custom_call.1} parent=23 // pred_fallthru
          _
        // Predicated region
        $region29: #{tpu_custom_call.1} parent=23 // pred_check
          %p204 = pneg %p61
        $region30: #{tpu_custom_call.1} parent=23 // pred_check_branch
          %206 = sbr.rel (%p204) target = $region32
        $region31: #{tpu_custom_call.1} parent=23 // pred_region
          %p207 = scmp.lt.s32.totalorder %s15, 1
          %s208 = scalar_select %p207, %s15, 1
          %s209 = smul.addr %s208, 2
          %s210 = smul.addr %s209, 8
          %s211 = scalar_lea.vmem %s1, %s210
        $region32: #{tpu_custom_call.1} parent=23 // pred_fallthru
          _
        // Predicated region
        $region33: #{tpu_custom_call.1} parent=23 // pred_check
          %p212 = pneg %p87
        $region34: #{tpu_custom_call.1} parent=23 // pred_check_branch
          %214 = sbr.rel (%p212) target = $region36
        $region35: #{tpu_custom_call.1} parent=23 // pred_region
          %p215 = scmp.lt.s32.totalorder %s15, 1
          %s216 = scalar_select %p215, %s15, 1
          %s217 = scalar_lea.vmem %s2, %s216
        $region36: #{tpu_custom_call.1} parent=23 // pred_fallthru
          _
      $region24: #{tpu_custom_call.1} parent=5 // pred_fallthru
        _
      %p218 = scmp.le.s32.totalorder 1, %s15
      %p219 = scmp.lt.s32.totalorder %s15, 3
      %p220 = pnand %p218, %p219
      %p221 = pneg %p220
      // Predicated region
      $region37: #{tpu_custom_call.1} parent=5 // pred_check
        _
      $region38: #{tpu_custom_call.1} parent=5 // pred_check_branch
        %223 = sbr.rel (%p220) target = $region40
      $region39: #{tpu_custom_call.1} parent=5 // pred_region
        %s224 = ssub.s32 %s15, 1
        // Predicated region
        $region41: #{tpu_custom_call.1} parent=39 // pred_check
          %p225 = pneg %p114
        $region42: #{tpu_custom_call.1} parent=39 // pred_check_branch
          %227 = sbr.rel (%p225) target = $region44
        $region43: #{tpu_custom_call.1} parent=39 // pred_region
          %228 = dma.done [#allocation4], 512
        $region44: #{tpu_custom_call.1} parent=39 // pred_fallthru
          _
        %p229 = scmp.lt.s32.totalorder %s20, 1
        %s230 = scalar_select %p229, %s20, 1
        %s231 = smul.addr %s230, 2
        %s232 = smul.addr %s231, 8
        %s233 = scalar_lea.vmem %s0, %s232
        %p234 = pneg %p41
        %p235 = pneg %p38
        %p236 = scmp.lt.s32.totalorder %s20, 1
        %s237 = scalar_select %p236, %s20, 1
        %s238 = smul.addr %s237, 2
        %s239 = smul.addr %s238, 8
        %s240 = scalar_lea.vmem %s1, %s239
        %p241 = pneg %p67
        %p242 = pneg %p64
        %p243 = scmp.lt.s32.totalorder %s20, 1
        %s244 = scalar_select %p243, %s20, 1
        %s245 = scalar_lea.vmem %s2, %s244
        %p246 = pneg %p93
        %p247 = pneg %p90
        %p248 = pneg %p114
        %p249 = pneg %p111
        %p250 = pneg %p135
        %p251 = pneg %p132
        %p252 = pneg %p161
        %p253 = pneg %p158
        %s254 = sand.u32 %s148, 1
        %s255 = scalar_lea.sflag [#allocation5], %s254
        %s256 = sand.u32 %s148, 1
        %s257 = smul.addr %s256, 16
        %s258 = scalar_lea.vmem [#allocation6], %s257
        %p259 = scmp.lt.s32.totalorder %s20, 1
        %s260 = scalar_select %p259, %s20, 1
        %s261 = smul.addr %s260, 2
        %s262 = smul.addr %s261, 8
        %s263 = scalar_lea.vmem %s0, %s262
        %p264 = scmp.lt.s32.totalorder %s20, 1
        %s265 = scalar_select %p264, %s20, 1
        %s266 = smul.addr %s265, 2
        %s267 = smul.addr %s266, 8
        %s268 = scalar_lea.vmem %s1, %s267
        %p269 = scmp.lt.s32.totalorder %s20, 1
        %s270 = scalar_select %p269, %s20, 1
        %s271 = scalar_lea.vmem %s2, %s270
        %v272 = vld [vmem:[%s263] sm:$0xff]
        %v273 = vld [vmem:[%s263 + $0x8] sm:$0xff]
        %v274 = vld [vmem:[%s268] sm:$0xff]
        %v275 = vld [vmem:[%s268 + $0x8] sm:$0xff]
        %v276 = vld [vmem:[%s271] sm:$0x1]
        %v277 = vld [vmem:[#allocation3] sm:$0xff]
        %v278 = vld [vmem:[#allocation3 + $0x8] sm:$0xff]
        %v279 = vld [vmem:[#allocation3 + $0x10] sm:$0xff]
        %v280 = vld [vmem:[#allocation3 + $0x18] sm:$0xff]
        %v281 = vld [vmem:[%s4] sm:$0x1]
        %v283 = vlaneseq
        %v284 = vshrl.u32 %v283, 7
        %v285 = vsub.s32 0, %v284
        %v286 = vrot.slane %v281, %v285
        %vm288 = vcmask 261120
        %v290 = vsel %vm288, %v272, 0
        %v293 = vsel %vm288, %v273, 0
        %295 = vmatprep.subr.mxu0 0.0
        %296 = vmatpush1.msra.mxu0 %v277
        %297 = vmatprep.subr.mxu0 0.0
        %298 = vmatpush1.msra.mxu0 %v278
        %299 = vmatprep.subr.mxu0 0.0
        %300 = vmatpush1.msra.mxu0 %v279
        %301 = vmatprep.subr.mxu0 0.0
        %302 = vmatpush1.msra.mxu0 %v280
        %303 = vmatprep.subr.mxu0 0.0
        %304 = vmatpush1.msra.mxu0 0.0
        %305 = vmatprep.subr.mxu0 0.0
        %306 = vmatpush1.msra.mxu0 0.0
        %307 = vmatprep.subr.mxu0 0.0
        %308 = vmatpush1.msra.mxu0 0.0
        %309 = vmatprep.subr.mxu0 0.0
        %310 = vmatpush1.msra.mxu0 0.0
        %311 = vmatprep.subr.mxu0 0.0
        %312 = vmatpush1.msra.mxu0 0.0
        %313 = vmatprep.subr.mxu0 0.0
        %314 = vmatpush1.msra.mxu0 0.0
        %315 = vmatprep.subr.mxu0 0.0
        %316 = vmatpush1.msra.mxu0 0.0
        %317 = vmatprep.subr.mxu0 0.0
        %318 = vmatpush1.msra.mxu0 0.0
        %319 = vmatprep.subr.mxu0 0.0
        %320 = vmatpush1.msra.mxu0 0.0
        %321 = vmatprep.subr.mxu0 0.0
        %322 = vmatpush1.msra.mxu0 0.0
        %323 = vmatprep.subr.mxu0 0.0
        %324 = vmatpush1.msra.mxu0 0.0
        %325 = vmatprep.subr.mxu0 0.0
        %326 = vmatpush1.msra.mxu0 0.0
        %327 = vmatprep.subr.mxu0 0.0
        %328 = vmatpush1.msra.mxu0 0.0
        %329 = vmatprep.subr.mxu0 0.0
        %330 = vmatpush1.msra.mxu0 0.0
        %331 = vmatprep.subr.mxu0 0.0
        %332 = vmatpush1.msra.mxu0 0.0
        %333 = vmatprep.subr.mxu0 0.0
        %334 = vmatpush1.msra.mxu0 0.0
        %335 = vmatprep.subr.mxu0 0.0
        %336 = vmatpush1.msra.mxu0 0.0
        %337 = vmatprep.subr.mxu0 0.0
        %338 = vmatpush1.msra.mxu0 0.0
        %339 = vmatprep.subr.mxu0 0.0
        %340 = vmatpush1.msra.mxu0 0.0
        %341 = vmatprep.subr.mxu0 0.0
        %342 = vmatpush1.msra.mxu0 0.0
        %343 = vmatprep.subr.mxu0 0.0
        %344 = vmatpush1.msra.mxu0 0.0
        %345 = vmatprep.subr.mxu0 0.0
        %346 = vmatpush1.msra.mxu0 0.0
        %347 = vmatprep.subr.mxu0 0.0
        %348 = vmatpush1.msra.mxu0 0.0
        %349 = vmatprep.subr.mxu0 0.0
        %350 = vmatpush1.msra.mxu0 0.0
        %351 = vmatprep.subr.mxu0 0.0
        %352 = vmatpush1.msra.mxu0 0.0
        %353 = vmatprep.subr.mxu0 0.0
        %354 = vmatpush1.msra.mxu0 0.0
        %355 = vmatprep.subr.mxu0 0.0
        %356 = vmatpush1.msra.mxu0 0.0
        %357 = vmatprep.subr.mxu0 0.0
        %358 = vmatpush1.msra.mxu0 0.0
        %359 = vmatprep.mubr.f32.mxu0 0.0
        %360 = vmatmul.mubr.f32.gmra.mrb[0].mxu0 %v290
        %v361 = vpop.f32.mrb[0].mxu0
        %v362 = vadd.f32 %v286, %v361
        %v363 = vpop.f32.mrb[0].mxu0
        %364 = vmatprep.mubr.f32.mxu0 0.0
        %365 = vmatmul.mubr.f32.gmra.mrb[0].mxu0 %v293
        %v366 = vpop.f32.mrb[0].mxu0
        %v367 = vadd.f32 %v286, %v366
        %v368 = vpop.f32.mrb[0].mxu0
        %369 = vdwg.mxu0
        %v370 = vsub.f32 %v276, 1.0
        %v371 = vmul.f32 %v370, 35355.34
        %v373 = vlaneseq
        %v374 = vshrl.u32 %v373, 7
        %v375 = vsub.s32 0, %v374
        %v376 = vrot.slane %v371, %v375
        %380 = vrot.lane.b32.xlu0 %v362, 120
        %v381 = vpop.permute.xlu0 %380
        %382 = vrot.lane.b32.xlu0 %v367, 120
        %v383 = vpop.permute.xlu0 %382
        %vm384 = vcmask 64512
        %v385 = vsel %vm384, %v362, 0
        %v387 = vsel %vm384, %v367, 0
        %v389 = vsel %vm384, %v381, 0
        %v391 = vsel %vm384, %v383, 0
        %393 = vmatprep.subr.mxu0 0.0
        %394 = vmatpush1.xpose.msra.mxu0 %v389
        %395 = vmatprep.subr.mxu0 0.0
        %396 = vmatpush1.xpose.msra.mxu0 %v391
        %397 = vmatprep.subr.mxu0 0.0
        %398 = vmatpush1.xpose.msra.mxu0 0.0
        %399 = vmatprep.subr.mxu0 0.0
        %400 = vmatpush1.xpose.msra.mxu0 0.0
        %401 = vmatprep.subr.mxu0 0.0
        %402 = vmatpush1.xpose.msra.mxu0 0.0
        %403 = vmatprep.subr.mxu0 0.0
        %404 = vmatpush1.xpose.msra.mxu0 0.0
        %405 = vmatprep.subr.mxu0 0.0
        %406 = vmatpush1.xpose.msra.mxu0 0.0
        %407 = vmatprep.subr.mxu0 0.0
        %408 = vmatpush1.xpose.msra.mxu0 0.0
        %409 = vmatprep.subr.mxu0 0.0
        %410 = vmatpush1.xpose.msra.mxu0 0.0
        %411 = vmatprep.subr.mxu0 0.0
        %412 = vmatpush1.xpose.msra.mxu0 0.0
        %413 = vmatprep.subr.mxu0 0.0
        %414 = vmatpush1.xpose.msra.mxu0 0.0
        %415 = vmatprep.subr.mxu0 0.0
        %416 = vmatpush1.xpose.msra.mxu0 0.0
        %417 = vmatprep.subr.mxu0 0.0
        %418 = vmatpush1.xpose.msra.mxu0 0.0
        %419 = vmatprep.subr.mxu0 0.0
        %420 = vmatpush1.xpose.msra.mxu0 0.0
        %421 = vmatprep.subr.mxu0 0.0
        %422 = vmatpush1.xpose.msra.mxu0 0.0
        %423 = vmatprep.subr.mxu0 0.0
        %424 = vmatpush1.xpose.msra.mxu0 0.0
        %425 = vmatprep.subr.mxu0 0.0
        %426 = vmatpush1.xpose.msra.mxu0 0.0
        %427 = vmatprep.subr.mxu0 0.0
        %428 = vmatpush1.xpose.msra.mxu0 0.0
        %429 = vmatprep.subr.mxu0 0.0
        %430 = vmatpush1.xpose.msra.mxu0 0.0
        %431 = vmatprep.subr.mxu0 0.0
        %432 = vmatpush1.xpose.msra.mxu0 0.0
        %433 = vmatprep.subr.mxu0 0.0
        %434 = vmatpush1.xpose.msra.mxu0 0.0
        %435 = vmatprep.subr.mxu0 0.0
        %436 = vmatpush1.xpose.msra.mxu0 0.0
        %437 = vmatprep.subr.mxu0 0.0
        %438 = vmatpush1.xpose.msra.mxu0 0.0
        %439 = vmatprep.subr.mxu0 0.0
        %440 = vmatpush1.xpose.msra.mxu0 0.0
        %441 = vmatprep.subr.mxu0 0.0
        %442 = vmatpush1.xpose.msra.mxu0 0.0
        %443 = vmatprep.subr.mxu0 0.0
        %444 = vmatpush1.xpose.msra.mxu0 0.0
        %445 = vmatprep.subr.mxu0 0.0
        %446 = vmatpush1.xpose.msra.mxu0 0.0
        %447 = vmatprep.subr.mxu0 0.0
        %448 = vmatpush1.xpose.msra.mxu0 0.0
        %449 = vmatprep.subr.mxu0 0.0
        %450 = vmatpush1.xpose.msra.mxu0 0.0
        %451 = vmatprep.subr.mxu0 0.0
        %452 = vmatpush1.xpose.msra.mxu0 0.0
        %453 = vmatprep.subr.mxu0 0.0
        %454 = vmatpush1.xpose.msra.mxu0 0.0
        %455 = vmatprep.subr.mxu0 0.0
        %456 = vmatpush1.xpose.msra.mxu0 0.0
        %457 = vmatprep.mubr.f32.mxu0 0.0
        %458 = vmatmul.mubr.f32.gmra.mrb[0].mxu0 %v385
        %v459 = vpop.f32.mrb[0].mxu0
        %v460 = vadd.f32 %v376, %v459
        %v461 = vpop.f32.mrb[0].mxu0
        %462 = vmatprep.mubr.f32.mxu0 0.0
        %463 = vmatmul.mubr.f32.gmra.mrb[0].mxu0 %v387
        %v464 = vpop.f32.mrb[0].mxu0
        %v465 = vadd.f32 %v376, %v464
        %v466 = vpop.f32.mrb[0].mxu0
        %467 = vdwg.mxu0
        %vm468 = vcmask 130048
        %v469 = vsel %vm468, %v460, -inf
        %470 = vmax.xlane.f32.xlu0 %v469
        %v471 = vpop.xlane.xlu0 %470
        %v472 = vsel %vm468, %v465, -inf
        %473 = vmax.xlane.f32.xlu0 %v472
        %v474 = vpop.xlane.xlu0 %473
        %v475 = vsub.f32 %v460, %v471
        %v476 = vsub.f32 %v465, %v474
        %v477 = vmul.f32 %v475, 1.442695
        %v478 = vpow.pop %v477
        %v479 = vmul.f32 %v476, 1.442695
        %v480 = vpow.pop %v479
        %v481 = vsel %vm468, %v478, 0.0
        %482 = vadd.xlane.f32.xlu0 %v481
        %v483 = vpop.xlane.xlu0 %482
        %v484 = vsel %vm468, %v480, 0.0
        %485 = vadd.xlane.f32.xlu0 %v484
        %v486 = vpop.xlane.xlu0 %485
        %v487 = vrcp.pop %v483
        %v488 = vrcp.pop %v486
        %489 = vrot.lane.b32.xlu0 %v362, 112
        %v490 = vpop.permute.xlu0 %489
        %491 = vrot.lane.b32.xlu0 %v367, 112
        %v492 = vpop.permute.xlu0 %491
        %v496 = vsel %vm468, %v478, 0
        %v499 = vsel %vm468, %v480, 0
        %501 = vmatprep.subr.mxu0 0.0
        %502 = vmatpush1.msra.mxu0 %v490
        %503 = vmatprep.subr.mxu0 0.0
        %504 = vmatpush1.msra.mxu0 %v492
        %505 = vmatprep.subr.mxu0 0.0
        %506 = vmatpush1.msra.mxu0 0.0
        %507 = vmatprep.subr.mxu0 0.0
        %508 = vmatpush1.msra.mxu0 0.0
        %509 = vmatprep.subr.mxu0 0.0
        %510 = vmatpush1.msra.mxu0 0.0
        %511 = vmatprep.subr.mxu0 0.0
        %512 = vmatpush1.msra.mxu0 0.0
        %513 = vmatprep.subr.mxu0 0.0
        %514 = vmatpush1.msra.mxu0 0.0
        %515 = vmatprep.subr.mxu0 0.0
        %516 = vmatpush1.msra.mxu0 0.0
        %517 = vmatprep.subr.mxu0 0.0
        %518 = vmatpush1.msra.mxu0 0.0
        %519 = vmatprep.subr.mxu0 0.0
        %520 = vmatpush1.msra.mxu0 0.0
        %521 = vmatprep.subr.mxu0 0.0
        %522 = vmatpush1.msra.mxu0 0.0
        %523 = vmatprep.subr.mxu0 0.0
        %524 = vmatpush1.msra.mxu0 0.0
        %525 = vmatprep.subr.mxu0 0.0
        %526 = vmatpush1.msra.mxu0 0.0
        %527 = vmatprep.subr.mxu0 0.0
        %528 = vmatpush1.msra.mxu0 0.0
        %529 = vmatprep.subr.mxu0 0.0
        %530 = vmatpush1.msra.mxu0 0.0
        %531 = vmatprep.subr.mxu0 0.0
        %532 = vmatpush1.msra.mxu0 0.0
        %533 = vmatprep.subr.mxu0 0.0
        %534 = vmatpush1.msra.mxu0 0.0
        %535 = vmatprep.subr.mxu0 0.0
        %536 = vmatpush1.msra.mxu0 0.0
        %537 = vmatprep.subr.mxu0 0.0
        %538 = vmatpush1.msra.mxu0 0.0
        %539 = vmatprep.subr.mxu0 0.0
        %540 = vmatpush1.msra.mxu0 0.0
        %541 = vmatprep.subr.mxu0 0.0
        %542 = vmatpush1.msra.mxu0 0.0
        %543 = vmatprep.subr.mxu0 0.0
        %544 = vmatpush1.msra.mxu0 0.0
        %545 = vmatprep.subr.mxu0 0.0
        %546 = vmatpush1.msra.mxu0 0.0
        %547 = vmatprep.subr.mxu0 0.0
        %548 = vmatpush1.msra.mxu0 0.0
        %549 = vmatprep.subr.mxu0 0.0
        %550 = vmatpush1.msra.mxu0 0.0
        %551 = vmatprep.subr.mxu0 0.0
        %552 = vmatpush1.msra.mxu0 0.0
        %553 = vmatprep.subr.mxu0 0.0
        %554 = vmatpush1.msra.mxu0 0.0
        %555 = vmatprep.subr.mxu0 0.0
        %556 = vmatpush1.msra.mxu0 0.0
        %557 = vmatprep.subr.mxu0 0.0
        %558 = vmatpush1.msra.mxu0 0.0
        %559 = vmatprep.subr.mxu0 0.0
        %560 = vmatpush1.msra.mxu0 0.0
        %561 = vmatprep.subr.mxu0 0.0
        %562 = vmatpush1.msra.mxu0 0.0
        %563 = vmatprep.subr.mxu0 0.0
        %564 = vmatpush1.msra.mxu0 0.0
        %565 = vmatprep.mubr.f32.mxu0 0.0
        %566 = vmatmul.mubr.f32.gmra.mrb[0].mxu0 %v496
        %v567 = vpop.f32.mrb[0].mxu0
        %v568 = vadd.f32 0.0, %v567
        %v569 = vpop.f32.mrb[0].mxu0
        %570 = vmatprep.mubr.f32.mxu0 0.0
        %571 = vmatmul.mubr.f32.gmra.mrb[0].mxu0 %v499
        %v572 = vpop.f32.mrb[0].mxu0
        %v573 = vadd.f32 0.0, %v572
        %v574 = vpop.f32.mrb[0].mxu0
        %575 = vdwg.mxu0
        %v576 = vmul.f32 %v568, %v487
        %v577 = vmul.f32 %v573, %v488
        %578 = vst.msk [vmem:[#allocation2] sm:$0xff] %vm384, %v576
        %579 = vst.msk [vmem:[#allocation2 + $0x8] sm:$0xff] %vm384, %v577
        %580 = vrot.lane.b32.xlu0 %v362, 104
        %v581 = vpop.permute.xlu0 %580
        %582 = vrot.lane.b32.xlu0 %v367, 104
        %v583 = vpop.permute.xlu0 %582
        %584 = vrot.lane.b32.xlu0 %v362, 96
        %v585 = vpop.permute.xlu0 %584
        %586 = vrot.lane.b32.xlu0 %v367, 96
        %v587 = vpop.permute.xlu0 %586
        %v588 = vsel %vm384, %v581, 0
        %v590 = vsel %vm384, %v583, 0
        %v592 = vsel %vm384, %v585, 0
        %v594 = vsel %vm384, %v587, 0
        %596 = vmatprep.subr.mxu0 0.0
        %597 = vmatpush1.xpose.msra.mxu0 %v592
        %598 = vmatprep.subr.mxu0 0.0
        %599 = vmatpush1.xpose.msra.mxu0 %v594
        %600 = vmatprep.subr.mxu0 0.0
        %601 = vmatpush1.xpose.msra.mxu0 0.0
        %602 = vmatprep.subr.mxu0 0.0
        %603 = vmatpush1.xpose.msra.mxu0 0.0
        %604 = vmatprep.subr.mxu0 0.0
        %605 = vmatpush1.xpose.msra.mxu0 0.0
        %606 = vmatprep.subr.mxu0 0.0
        %607 = vmatpush1.xpose.msra.mxu0 0.0
        %608 = vmatprep.subr.mxu0 0.0
        %609 = vmatpush1.xpose.msra.mxu0 0.0
        %610 = vmatprep.subr.mxu0 0.0
        %611 = vmatpush1.xpose.msra.mxu0 0.0
        %612 = vmatprep.subr.mxu0 0.0
        %613 = vmatpush1.xpose.msra.mxu0 0.0
        %614 = vmatprep.subr.mxu0 0.0
        %615 = vmatpush1.xpose.msra.mxu0 0.0
        %616 = vmatprep.subr.mxu0 0.0
        %617 = vmatpush1.xpose.msra.mxu0 0.0
        %618 = vmatprep.subr.mxu0 0.0
        %619 = vmatpush1.xpose.msra.mxu0 0.0
        %620 = vmatprep.subr.mxu0 0.0
        %621 = vmatpush1.xpose.msra.mxu0 0.0
        %622 = vmatprep.subr.mxu0 0.0
        %623 = vmatpush1.xpose.msra.mxu0 0.0
        %624 = vmatprep.subr.mxu0 0.0
        %625 = vmatpush1.xpose.msra.mxu0 0.0
        %626 = vmatprep.subr.mxu0 0.0
        %627 = vmatpush1.xpose.msra.mxu0 0.0
        %628 = vmatprep.subr.mxu0 0.0
        %629 = vmatpush1.xpose.msra.mxu0 0.0
        %630 = vmatprep.subr.mxu0 0.0
        %631 = vmatpush1.xpose.msra.mxu0 0.0
        %632 = vmatprep.subr.mxu0 0.0
        %633 = vmatpush1.xpose.msra.mxu0 0.0
        %634 = vmatprep.subr.mxu0 0.0
        %635 = vmatpush1.xpose.msra.mxu0 0.0
        %636 = vmatprep.subr.mxu0 0.0
        %637 = vmatpush1.xpose.msra.mxu0 0.0
        %638 = vmatprep.subr.mxu0 0.0
        %639 = vmatpush1.xpose.msra.mxu0 0.0
        %640 = vmatprep.subr.mxu0 0.0
        %641 = vmatpush1.xpose.msra.mxu0 0.0
        %642 = vmatprep.subr.mxu0 0.0
        %643 = vmatpush1.xpose.msra.mxu0 0.0
        %644 = vmatprep.subr.mxu0 0.0
        %645 = vmatpush1.xpose.msra.mxu0 0.0
        %646 = vmatprep.subr.mxu0 0.0
        %647 = vmatpush1.xpose.msra.mxu0 0.0
        %648 = vmatprep.subr.mxu0 0.0
        %649 = vmatpush1.xpose.msra.mxu0 0.0
        %650 = vmatprep.subr.mxu0 0.0
        %651 = vmatpush1.xpose.msra.mxu0 0.0
        %652 = vmatprep.subr.mxu0 0.0
        %653 = vmatpush1.xpose.msra.mxu0 0.0
        %654 = vmatprep.subr.mxu0 0.0
        %655 = vmatpush1.xpose.msra.mxu0 0.0
        %656 = vmatprep.subr.mxu0 0.0
        %657 = vmatpush1.xpose.msra.mxu0 0.0
        %658 = vmatprep.subr.mxu0 0.0
        %659 = vmatpush1.xpose.msra.mxu0 0.0
        %660 = vmatprep.mubr.f32.mxu0 0.0
        %661 = vmatmul.mubr.f32.gmra.mrb[0].mxu0 %v588
        %v662 = vpop.f32.mrb[0].mxu0
        %v663 = vadd.f32 %v376, %v662
        %v664 = vpop.f32.mrb[0].mxu0
        %665 = vmatprep.mubr.f32.mxu0 0.0
        %666 = vmatmul.mubr.f32.gmra.mrb[0].mxu0 %v590
        %v667 = vpop.f32.mrb[0].mxu0
        %v668 = vadd.f32 %v376, %v667
        %v669 = vpop.f32.mrb[0].mxu0
        %670 = vdwg.mxu0
        %v671 = vsel %vm468, %v663, -inf
        %672 = vmax.xlane.f32.xlu0 %v671
        %v673 = vpop.xlane.xlu0 %672
        %v674 = vsel %vm468, %v668, -inf
        %675 = vmax.xlane.f32.xlu0 %v674
        %v676 = vpop.xlane.xlu0 %675
        %v677 = vsub.f32 %v663, %v673
        %v678 = vsub.f32 %v668, %v676
        %v679 = vmul.f32 %v677, 1.442695
        %v680 = vpow.pop %v679
        %v681 = vmul.f32 %v678, 1.442695
        %v682 = vpow.pop %v681
        %v683 = vsel %vm468, %v680, 0.0
        %684 = vadd.xlane.f32.xlu0 %v683
        %v685 = vpop.xlane.xlu0 %684
        %v686 = vsel %vm468, %v682, 0.0
        %687 = vadd.xlane.f32.xlu0 %v686
        %v688 = vpop.xlane.xlu0 %687
        %v689 = vrcp.pop %v685
        %v690 = vrcp.pop %v688
        %691 = vrot.lane.b32.xlu0 %v362, 88
        %v692 = vpop.permute.xlu0 %691
        %693 = vrot.lane.b32.xlu0 %v367, 88
        %v694 = vpop.permute.xlu0 %693
        %v698 = vsel %vm468, %v680, 0
        %v701 = vsel %vm468, %v682, 0
        %703 = vmatprep.subr.mxu0 0.0
        %704 = vmatpush1.msra.mxu0 %v692
        %705 = vmatprep.subr.mxu0 0.0
        %706 = vmatpush1.msra.mxu0 %v694
        %707 = vmatprep.subr.mxu0 0.0
        %708 = vmatpush1.msra.mxu0 0.0
        %709 = vmatprep.subr.mxu0 0.0
        %710 = vmatpush1.msra.mxu0 0.0
        %711 = vmatprep.subr.mxu0 0.0
        %712 = vmatpush1.msra.mxu0 0.0
        %713 = vmatprep.subr.mxu0 0.0
        %714 = vmatpush1.msra.mxu0 0.0
        %715 = vmatprep.subr.mxu0 0.0
        %716 = vmatpush1.msra.mxu0 0.0
        %717 = vmatprep.subr.mxu0 0.0
        %718 = vmatpush1.msra.mxu0 0.0
        %719 = vmatprep.subr.mxu0 0.0
        %720 = vmatpush1.msra.mxu0 0.0
        %721 = vmatprep.subr.mxu0 0.0
        %722 = vmatpush1.msra.mxu0 0.0
        %723 = vmatprep.subr.mxu0 0.0
        %724 = vmatpush1.msra.mxu0 0.0
        %725 = vmatprep.subr.mxu0 0.0
        %726 = vmatpush1.msra.mxu0 0.0
        %727 = vmatprep.subr.mxu0 0.0
        %728 = vmatpush1.msra.mxu0 0.0
        %729 = vmatprep.subr.mxu0 0.0
        %730 = vmatpush1.msra.mxu0 0.0
        %731 = vmatprep.subr.mxu0 0.0
        %732 = vmatpush1.msra.mxu0 0.0
        %733 = vmatprep.subr.mxu0 0.0
        %734 = vmatpush1.msra.mxu0 0.0
        %735 = vmatprep.subr.mxu0 0.0
        %736 = vmatpush1.msra.mxu0 0.0
        %737 = vmatprep.subr.mxu0 0.0
        %738 = vmatpush1.msra.mxu0 0.0
        %739 = vmatprep.subr.mxu0 0.0
        %740 = vmatpush1.msra.mxu0 0.0
        %741 = vmatprep.subr.mxu0 0.0
        %742 = vmatpush1.msra.mxu0 0.0
        %743 = vmatprep.subr.mxu0 0.0
        %744 = vmatpush1.msra.mxu0 0.0
        %745 = vmatprep.subr.mxu0 0.0
        %746 = vmatpush1.msra.mxu0 0.0
        %747 = vmatprep.subr.mxu0 0.0
        %748 = vmatpush1.msra.mxu0 0.0
        %749 = vmatprep.subr.mxu0 0.0
        %750 = vmatpush1.msra.mxu0 0.0
        %751 = vmatprep.subr.mxu0 0.0
        %752 = vmatpush1.msra.mxu0 0.0
        %753 = vmatprep.subr.mxu0 0.0
        %754 = vmatpush1.msra.mxu0 0.0
        %755 = vmatprep.subr.mxu0 0.0
        %756 = vmatpush1.msra.mxu0 0.0
        %757 = vmatprep.subr.mxu0 0.0
        %758 = vmatpush1.msra.mxu0 0.0
        %759 = vmatprep.subr.mxu0 0.0
        %760 = vmatpush1.msra.mxu0 0.0
        %761 = vmatprep.subr.mxu0 0.0
        %762 = vmatpush1.msra.mxu0 0.0
        %763 = vmatprep.subr.mxu0 0.0
        %764 = vmatpush1.msra.mxu0 0.0
        %765 = vmatprep.subr.mxu0 0.0
        %766 = vmatpush1.msra.mxu0 0.0
        %767 = vmatprep.mubr.f32.mxu0 0.0
        %768 = vmatmul.mubr.f32.gmra.mrb[0].mxu0 %v698
        %v769 = vpop.f32.mrb[0].mxu0
        %v770 = vadd.f32 0.0, %v769
        %v771 = vpop.f32.mrb[0].mxu0
        %772 = vmatprep.mubr.f32.mxu0 0.0
        %773 = vmatmul.mubr.f32.gmra.mrb[0].mxu0 %v701
        %v774 = vpop.f32.mrb[0].mxu0
        %v775 = vadd.f32 0.0, %v774
        %v776 = vpop.f32.mrb[0].mxu0
        %777 = vdwg.mxu0
        %v778 = vmul.f32 %v770, %v689
        %v779 = vmul.f32 %v775, %v690
        %782 = vrot.lane.b32.xlu0 %v778, 8
        %v783 = vpop.permute.xlu0 %782
        %784 = vrot.lane.b32.xlu0 %v779, 8
        %v785 = vpop.permute.xlu0 %784
        %vm788 = vcmask 130112
        %789 = vst.msk [vmem:[#allocation2] sm:$0xff] %vm788, %v783
        %790 = vst.msk [vmem:[#allocation2 + $0x8] sm:$0xff] %vm788, %v785
        %791 = vrot.lane.b32.xlu0 %v362, 80
        %v792 = vpop.permute.xlu0 %791
        %793 = vrot.lane.b32.xlu0 %v367, 80
        %v794 = vpop.permute.xlu0 %793
        %795 = vrot.lane.b32.xlu0 %v362, 72
        %v796 = vpop.permute.xlu0 %795
        %797 = vrot.lane.b32.xlu0 %v367, 72
        %v798 = vpop.permute.xlu0 %797
        %v799 = vsel %vm384, %v792, 0
        %v801 = vsel %vm384, %v794, 0
        %v803 = vsel %vm384, %v796, 0
        %v805 = vsel %vm384, %v798, 0
        %807 = vmatprep.subr.mxu0 0.0
        %808 = vmatpush1.xpose.msra.mxu0 %v803
        %809 = vmatprep.subr.mxu0 0.0
        %810 = vmatpush1.xpose.msra.mxu0 %v805
        %811 = vmatprep.subr.mxu0 0.0
        %812 = vmatpush1.xpose.msra.mxu0 0.0
        %813 = vmatprep.subr.mxu0 0.0
        %814 = vmatpush1.xpose.msra.mxu0 0.0
        %815 = vmatprep.subr.mxu0 0.0
        %816 = vmatpush1.xpose.msra.mxu0 0.0
        %817 = vmatprep.subr.mxu0 0.0
        %818 = vmatpush1.xpose.msra.mxu0 0.0
        %819 = vmatprep.subr.mxu0 0.0
        %820 = vmatpush1.xpose.msra.mxu0 0.0
        %821 = vmatprep.subr.mxu0 0.0
        %822 = vmatpush1.xpose.msra.mxu0 0.0
        %823 = vmatprep.subr.mxu0 0.0
        %824 = vmatpush1.xpose.msra.mxu0 0.0
        %825 = vmatprep.subr.mxu0 0.0
        %826 = vmatpush1.xpose.msra.mxu0 0.0
        %827 = vmatprep.subr.mxu0 0.0
        %828 = vmatpush1.xpose.msra.mxu0 0.0
        %829 = vmatprep.subr.mxu0 0.0
        %830 = vmatpush1.xpose.msra.mxu0 0.0
        %831 = vmatprep.subr.mxu0 0.0
        %832 = vmatpush1.xpose.msra.mxu0 0.0
        %833 = vmatprep.subr.mxu0 0.0
        %834 = vmatpush1.xpose.msra.mxu0 0.0
        %835 = vmatprep.subr.mxu0 0.0
        %836 = vmatpush1.xpose.msra.mxu0 0.0
        %837 = vmatprep.subr.mxu0 0.0
        %838 = vmatpush1.xpose.msra.mxu0 0.0
        %839 = vmatprep.subr.mxu0 0.0
        %840 = vmatpush1.xpose.msra.mxu0 0.0
        %841 = vmatprep.subr.mxu0 0.0
        %842 = vmatpush1.xpose.msra.mxu0 0.0
        %843 = vmatprep.subr.mxu0 0.0
        %844 = vmatpush1.xpose.msra.mxu0 0.0
        %845 = vmatprep.subr.mxu0 0.0
        %846 = vmatpush1.xpose.msra.mxu0 0.0
        %847 = vmatprep.subr.mxu0 0.0
        %848 = vmatpush1.xpose.msra.mxu0 0.0
        %849 = vmatprep.subr.mxu0 0.0
        %850 = vmatpush1.xpose.msra.mxu0 0.0
        %851 = vmatprep.subr.mxu0 0.0
        %852 = vmatpush1.xpose.msra.mxu0 0.0
        %853 = vmatprep.subr.mxu0 0.0
        %854 = vmatpush1.xpose.msra.mxu0 0.0
        %855 = vmatprep.subr.mxu0 0.0
        %856 = vmatpush1.xpose.msra.mxu0 0.0
        %857 = vmatprep.subr.mxu0 0.0
        %858 = vmatpush1.xpose.msra.mxu0 0.0
        %859 = vmatprep.subr.mxu0 0.0
        %860 = vmatpush1.xpose.msra.mxu0 0.0
        %861 = vmatprep.subr.mxu0 0.0
        %862 = vmatpush1.xpose.msra.mxu0 0.0
        %863 = vmatprep.subr.mxu0 0.0
        %864 = vmatpush1.xpose.msra.mxu0 0.0
        %865 = vmatprep.subr.mxu0 0.0
        %866 = vmatpush1.xpose.msra.mxu0 0.0
        %867 = vmatprep.subr.mxu0 0.0
        %868 = vmatpush1.xpose.msra.mxu0 0.0
        %869 = vmatprep.subr.mxu0 0.0
        %870 = vmatpush1.xpose.msra.mxu0 0.0
        %871 = vmatprep.mubr.f32.mxu0 0.0
        %872 = vmatmul.mubr.f32.gmra.mrb[0].mxu0 %v799
        %v873 = vpop.f32.mrb[0].mxu0
        %v874 = vadd.f32 %v376, %v873
        %v875 = vpop.f32.mrb[0].mxu0
        %876 = vmatprep.mubr.f32.mxu0 0.0
        %877 = vmatmul.mubr.f32.gmra.mrb[0].mxu0 %v801
        %v878 = vpop.f32.mrb[0].mxu0
        %v879 = vadd.f32 %v376, %v878
        %v880 = vpop.f32.mrb[0].mxu0
        %881 = vdwg.mxu0
        %v882 = vsel %vm468, %v874, -inf
        %883 = vmax.xlane.f32.xlu0 %v882
        %v884 = vpop.xlane.xlu0 %883
        %v885 = vsel %vm468, %v879, -inf
        %886 = vmax.xlane.f32.xlu0 %v885
        %v887 = vpop.xlane.xlu0 %886
        %v888 = vsub.f32 %v874, %v884
        %v889 = vsub.f32 %v879, %v887
        %v890 = vmul.f32 %v888, 1.442695
        %v891 = vpow.pop %v890
        %v892 = vmul.f32 %v889, 1.442695
        %v893 = vpow.pop %v892
        %v894 = vsel %vm468, %v891, 0.0
        %895 = vadd.xlane.f32.xlu0 %v894
        %v896 = vpop.xlane.xlu0 %895
        %v897 = vsel %vm468, %v893, 0.0
        %898 = vadd.xlane.f32.xlu0 %v897
        %v899 = vpop.xlane.xlu0 %898
        %v900 = vrcp.pop %v896
        %v901 = vrcp.pop %v899
        %902 = vrot.lane.b32.xlu0 %v362, 64
        %v903 = vpop.permute.xlu0 %902
        %904 = vrot.lane.b32.xlu0 %v367, 64
        %v905 = vpop.permute.xlu0 %904
        %v909 = vsel %vm468, %v891, 0
        %v912 = vsel %vm468, %v893, 0
        %914 = vmatprep.subr.mxu0 0.0
        %915 = vmatpush1.msra.mxu0 %v903
        %916 = vmatprep.subr.mxu0 0.0
        %917 = vmatpush1.msra.mxu0 %v905
        %918 = vmatprep.subr.mxu0 0.0
        %919 = vmatpush1.msra.mxu0 0.0
        %920 = vmatprep.subr.mxu0 0.0
        %921 = vmatpush1.msra.mxu0 0.0
        %922 = vmatprep.subr.mxu0 0.0
        %923 = vmatpush1.msra.mxu0 0.0
        %924 = vmatprep.subr.mxu0 0.0
        %925 = vmatpush1.msra.mxu0 0.0
        %926 = vmatprep.subr.mxu0 0.0
        %927 = vmatpush1.msra.mxu0 0.0
        %928 = vmatprep.subr.mxu0 0.0
        %929 = vmatpush1.msra.mxu0 0.0
        %930 = vmatprep.subr.mxu0 0.0
        %931 = vmatpush1.msra.mxu0 0.0
        %932 = vmatprep.subr.mxu0 0.0
        %933 = vmatpush1.msra.mxu0 0.0
        %934 = vmatprep.subr.mxu0 0.0
        %935 = vmatpush1.msra.mxu0 0.0
        %936 = vmatprep.subr.mxu0 0.0
        %937 = vmatpush1.msra.mxu0 0.0
        %938 = vmatprep.subr.mxu0 0.0
        %939 = vmatpush1.msra.mxu0 0.0
        %940 = vmatprep.subr.mxu0 0.0
        %941 = vmatpush1.msra.mxu0 0.0
        %942 = vmatprep.subr.mxu0 0.0
        %943 = vmatpush1.msra.mxu0 0.0
        %944 = vmatprep.subr.mxu0 0.0
        %945 = vmatpush1.msra.mxu0 0.0
        %946 = vmatprep.subr.mxu0 0.0
        %947 = vmatpush1.msra.mxu0 0.0
        %948 = vmatprep.subr.mxu0 0.0
        %949 = vmatpush1.msra.mxu0 0.0
        %950 = vmatprep.subr.mxu0 0.0
        %951 = vmatpush1.msra.mxu0 0.0
        %952 = vmatprep.subr.mxu0 0.0
        %953 = vmatpush1.msra.mxu0 0.0
        %954 = vmatprep.subr.mxu0 0.0
        %955 = vmatpush1.msra.mxu0 0.0
        %956 = vmatprep.subr.mxu0 0.0
        %957 = vmatpush1.msra.mxu0 0.0
        %958 = vmatprep.subr.mxu0 0.0
        %959 = vmatpush1.msra.mxu0 0.0
        %960 = vmatprep.subr.mxu0 0.0
        %961 = vmatpush1.msra.mxu0 0.0
        %962 = vmatprep.subr.mxu0 0.0
        %963 = vmatpush1.msra.mxu0 0.0
        %964 = vmatprep.subr.mxu0 0.0
        %965 = vmatpush1.msra.mxu0 0.0
        %966 = vmatprep.subr.mxu0 0.0
        %967 = vmatpush1.msra.mxu0 0.0
        %968 = vmatprep.subr.mxu0 0.0
        %969 = vmatpush1.msra.mxu0 0.0
        %970 = vmatprep.subr.mxu0 0.0
        %971 = vmatpush1.msra.mxu0 0.0
        %972 = vmatprep.subr.mxu0 0.0
        %973 = vmatpush1.msra.mxu0 0.0
        %974 = vmatprep.subr.mxu0 0.0
        %975 = vmatpush1.msra.mxu0 0.0
        %976 = vmatprep.subr.mxu0 0.0
        %977 = vmatpush1.msra.mxu0 0.0
        %978 = vmatprep.mubr.f32.mxu0 0.0
        %979 = vmatmul.mubr.f32.gmra.mrb[0].mxu0 %v909
        %v980 = vpop.f32.mrb[0].mxu0
        %v981 = vadd.f32 0.0, %v980
        %v982 = vpop.f32.mrb[0].mxu0
        %983 = vmatprep.mubr.f32.mxu0 0.0
        %984 = vmatmul.mubr.f32.gmra.mrb[0].mxu0 %v912
        %v985 = vpop.f32.mrb[0].mxu0
        %v986 = vadd.f32 0.0, %v985
        %v987 = vpop.f32.mrb[0].mxu0
        %988 = vdwg.mxu0
        %v989 = vmul.f32 %v981, %v900
        %v990 = vmul.f32 %v986, %v901
        %993 = vrot.lane.b32.xlu0 %v989, 16
        %v994 = vpop.permute.xlu0 %993
        %995 = vrot.lane.b32.xlu0 %v990, 16
        %v996 = vpop.permute.xlu0 %995
        %vm999 = vcmask 195712
        %1000 = vst.msk [vmem:[#allocation2] sm:$0xff] %vm999, %v994
        %1001 = vst.msk [vmem:[#allocation2 + $0x8] sm:$0xff] %vm999, %v996
        %1002 = vrot.lane.b32.xlu0 %v362, 56
        %v1003 = vpop.permute.xlu0 %1002
        %1004 = vrot.lane.b32.xlu0 %v367, 56
        %v1005 = vpop.permute.xlu0 %1004
        %1006 = vrot.lane.b32.xlu0 %v362, 48
        %v1007 = vpop.permute.xlu0 %1006
        %1008 = vrot.lane.b32.xlu0 %v367, 48
        %v1009 = vpop.permute.xlu0 %1008
        %v1010 = vsel %vm384, %v1003, 0
        %v1012 = vsel %vm384, %v1005, 0
        %v1014 = vsel %vm384, %v1007, 0
        %v1016 = vsel %vm384, %v1009, 0
        %1018 = vmatprep.subr.mxu0 0.0
        %1019 = vmatpush1.xpose.msra.mxu0 %v1014
        %1020 = vmatprep.subr.mxu0 0.0
        %1021 = vmatpush1.xpose.msra.mxu0 %v1016
        %1022 = vmatprep.subr.mxu0 0.0
        %1023 = vmatpush1.xpose.msra.mxu0 0.0
        %1024 = vmatprep.subr.mxu0 0.0
        %1025 = vmatpush1.xpose.msra.mxu0 0.0
        %1026 = vmatprep.subr.mxu0 0.0
        %1027 = vmatpush1.xpose.msra.mxu0 0.0
        %1028 = vmatprep.subr.mxu0 0.0
        %1029 = vmatpush1.xpose.msra.mxu0 0.0
        %1030 = vmatprep.subr.mxu0 0.0
        %1031 = vmatpush1.xpose.msra.mxu0 0.0
        %1032 = vmatprep.subr.mxu0 0.0
        %1033 = vmatpush1.xpose.msra.mxu0 0.0
        %1034 = vmatprep.subr.mxu0 0.0
        %1035 = vmatpush1.xpose.msra.mxu0 0.0
        %1036 = vmatprep.subr.mxu0 0.0
        %1037 = vmatpush1.xpose.msra.mxu0 0.0
        %1038 = vmatprep.subr.mxu0 0.0
        %1039 = vmatpush1.xpose.msra.mxu0 0.0
        %1040 = vmatprep.subr.mxu0 0.0
        %1041 = vmatpush1.xpose.msra.mxu0 0.0
        %1042 = vmatprep.subr.mxu0 0.0
        %1043 = vmatpush1.xpose.msra.mxu0 0.0
        %1044 = vmatprep.subr.mxu0 0.0
        %1045 = vmatpush1.xpose.msra.mxu0 0.0
        %1046 = vmatprep.subr.mxu0 0.0
        %1047 = vmatpush1.xpose.msra.mxu0 0.0
        %1048 = vmatprep.subr.mxu0 0.0
        %1049 = vmatpush1.xpose.msra.mxu0 0.0
        %1050 = vmatprep.subr.mxu0 0.0
        %1051 = vmatpush1.xpose.msra.mxu0 0.0
        %1052 = vmatprep.subr.mxu0 0.0
        %1053 = vmatpush1.xpose.msra.mxu0 0.0
        %1054 = vmatprep.subr.mxu0 0.0
        %1055 = vmatpush1.xpose.msra.mxu0 0.0
        %1056 = vmatprep.subr.mxu0 0.0
        %1057 = vmatpush1.xpose.msra.mxu0 0.0
        %1058 = vmatprep.subr.mxu0 0.0
        %1059 = vmatpush1.xpose.msra.mxu0 0.0
        %1060 = vmatprep.subr.mxu0 0.0
        %1061 = vmatpush1.xpose.msra.mxu0 0.0
        %1062 = vmatprep.subr.mxu0 0.0
        %1063 = vmatpush1.xpose.msra.mxu0 0.0
        %1064 = vmatprep.subr.mxu0 0.0
        %1065 = vmatpush1.xpose.msra.mxu0 0.0
        %1066 = vmatprep.subr.mxu0 0.0
        %1067 = vmatpush1.xpose.msra.mxu0 0.0
        %1068 = vmatprep.subr.mxu0 0.0
        %1069 = vmatpush1.xpose.msra.mxu0 0.0
        %1070 = vmatprep.subr.mxu0 0.0
        %1071 = vmatpush1.xpose.msra.mxu0 0.0
        %1072 = vmatprep.subr.mxu0 0.0
        %1073 = vmatpush1.xpose.msra.mxu0 0.0
        %1074 = vmatprep.subr.mxu0 0.0
        %1075 = vmatpush1.xpose.msra.mxu0 0.0
        %1076 = vmatprep.subr.mxu0 0.0
        %1077 = vmatpush1.xpose.msra.mxu0 0.0
        %1078 = vmatprep.subr.mxu0 0.0
        %1079 = vmatpush1.xpose.msra.mxu0 0.0
        %1080 = vmatprep.subr.mxu0 0.0
        %1081 = vmatpush1.xpose.msra.mxu0 0.0
        %1082 = vmatprep.mubr.f32.mxu0 0.0
        %1083 = vmatmul.mubr.f32.gmra.mrb[0].mxu0 %v1010
        %v1084 = vpop.f32.mrb[0].mxu0
        %v1085 = vadd.f32 %v376, %v1084
        %v1086 = vpop.f32.mrb[0].mxu0
        %1087 = vmatprep.mubr.f32.mxu0 0.0
        %1088 = vmatmul.mubr.f32.gmra.mrb[0].mxu0 %v1012
        %v1089 = vpop.f32.mrb[0].mxu0
        %v1090 = vadd.f32 %v376, %v1089
        %v1091 = vpop.f32.mrb[0].mxu0
        %1092 = vdwg.mxu0
        %v1093 = vsel %vm468, %v1085, -inf
        %1094 = vmax.xlane.f32.xlu0 %v1093
        %v1095 = vpop.xlane.xlu0 %1094
        %v1096 = vsel %vm468, %v1090, -inf
        %1097 = vmax.xlane.f32.xlu0 %v1096
        %v1098 = vpop.xlane.xlu0 %1097
        %v1099 = vsub.f32 %v1085, %v1095
        %v1100 = vsub.f32 %v1090, %v1098
        %v1101 = vmul.f32 %v1099, 1.442695
        %v1102 = vpow.pop %v1101
        %v1103 = vmul.f32 %v1100, 1.442695
        %v1104 = vpow.pop %v1103
        %v1105 = vsel %vm468, %v1102, 0.0
        %1106 = vadd.xlane.f32.xlu0 %v1105
        %v1107 = vpop.xlane.xlu0 %1106
        %v1108 = vsel %vm468, %v1104, 0.0
        %1109 = vadd.xlane.f32.xlu0 %v1108
        %v1110 = vpop.xlane.xlu0 %1109
        %v1111 = vrcp.pop %v1107
        %v1112 = vrcp.pop %v1110
        %1113 = vrot.lane.b32.xlu0 %v362, 40
        %v1114 = vpop.permute.xlu0 %1113
        %1115 = vrot.lane.b32.xlu0 %v367, 40
        %v1116 = vpop.permute.xlu0 %1115
        %v1120 = vsel %vm468, %v1102, 0
        %v1123 = vsel %vm468, %v1104, 0
        %1125 = vmatprep.subr.mxu0 0.0
        %1126 = vmatpush1.msra.mxu0 %v1114
        %1127 = vmatprep.subr.mxu0 0.0
        %1128 = vmatpush1.msra.mxu0 %v1116
        %1129 = vmatprep.subr.mxu0 0.0
        %1130 = vmatpush1.msra.mxu0 0.0
        %1131 = vmatprep.subr.mxu0 0.0
        %1132 = vmatpush1.msra.mxu0 0.0
        %1133 = vmatprep.subr.mxu0 0.0
        %1134 = vmatpush1.msra.mxu0 0.0
        %1135 = vmatprep.subr.mxu0 0.0
        %1136 = vmatpush1.msra.mxu0 0.0
        %1137 = vmatprep.subr.mxu0 0.0
        %1138 = vmatpush1.msra.mxu0 0.0
        %1139 = vmatprep.subr.mxu0 0.0
        %1140 = vmatpush1.msra.mxu0 0.0
        %1141 = vmatprep.subr.mxu0 0.0
        %1142 = vmatpush1.msra.mxu0 0.0
        %1143 = vmatprep.subr.mxu0 0.0
        %1144 = vmatpush1.msra.mxu0 0.0
        %1145 = vmatprep.subr.mxu0 0.0
        %1146 = vmatpush1.msra.mxu0 0.0
        %1147 = vmatprep.subr.mxu0 0.0
        %1148 = vmatpush1.msra.mxu0 0.0
        %1149 = vmatprep.subr.mxu0 0.0
        %1150 = vmatpush1.msra.mxu0 0.0
        %1151 = vmatprep.subr.mxu0 0.0
        %1152 = vmatpush1.msra.mxu0 0.0
        %1153 = vmatprep.subr.mxu0 0.0
        %1154 = vmatpush1.msra.mxu0 0.0
        %1155 = vmatprep.subr.mxu0 0.0
        %1156 = vmatpush1.msra.mxu0 0.0
        %1157 = vmatprep.subr.mxu0 0.0
        %1158 = vmatpush1.msra.mxu0 0.0
        %1159 = vmatprep.subr.mxu0 0.0
        %1160 = vmatpush1.msra.mxu0 0.0
        %1161 = vmatprep.subr.mxu0 0.0
        %1162 = vmatpush1.msra.mxu0 0.0
        %1163 = vmatprep.subr.mxu0 0.0
        %1164 = vmatpush1.msra.mxu0 0.0
        %1165 = vmatprep.subr.mxu0 0.0
        %1166 = vmatpush1.msra.mxu0 0.0
        %1167 = vmatprep.subr.mxu0 0.0
        %1168 = vmatpush1.msra.mxu0 0.0
        %1169 = vmatprep.subr.mxu0 0.0
        %1170 = vmatpush1.msra.mxu0 0.0
        %1171 = vmatprep.subr.mxu0 0.0
        %1172 = vmatpush1.msra.mxu0 0.0
        %1173 = vmatprep.subr.mxu0 0.0
        %1174 = vmatpush1.msra.mxu0 0.0
        %1175 = vmatprep.subr.mxu0 0.0
        %1176 = vmatpush1.msra.mxu0 0.0
        %1177 = vmatprep.subr.mxu0 0.0
        %1178 = vmatpush1.msra.mxu0 0.0
        %1179 = vmatprep.subr.mxu0 0.0
        %1180 = vmatpush1.msra.mxu0 0.0
        %1181 = vmatprep.subr.mxu0 0.0
        %1182 = vmatpush1.msra.mxu0 0.0
        %1183 = vmatprep.subr.mxu0 0.0
        %1184 = vmatpush1.msra.mxu0 0.0
        %1185 = vmatprep.subr.mxu0 0.0
        %1186 = vmatpush1.msra.mxu0 0.0
        %1187 = vmatprep.subr.mxu0 0.0
        %1188 = vmatpush1.msra.mxu0 0.0
        %1189 = vmatprep.mubr.f32.mxu0 0.0
        %1190 = vmatmul.mubr.f32.gmra.mrb[0].mxu0 %v1120
        %v1191 = vpop.f32.mrb[0].mxu0
        %v1192 = vadd.f32 0.0, %v1191
        %v1193 = vpop.f32.mrb[0].mxu0
        %1194 = vmatprep.mubr.f32.mxu0 0.0
        %1195 = vmatmul.mubr.f32.gmra.mrb[0].mxu0 %v1123
        %v1196 = vpop.f32.mrb[0].mxu0
        %v1197 = vadd.f32 0.0, %v1196
        %v1198 = vpop.f32.mrb[0].mxu0
        %1199 = vdwg.mxu0
        %v1200 = vmul.f32 %v1192, %v1111
        %v1201 = vmul.f32 %v1197, %v1112
        %1204 = vrot.lane.b32.xlu0 %v1200, 24
        %v1205 = vpop.permute.xlu0 %1204
        %1206 = vrot.lane.b32.xlu0 %v1201, 24
        %v1207 = vpop.permute.xlu0 %1206
        %vm1210 = vcmask 261312
        %1211 = vst.msk [vmem:[#allocation2] sm:$0xff] %vm1210, %v1205
        %1212 = vst.msk [vmem:[#allocation2 + $0x8] sm:$0xff] %vm1210, %v1207
        %v1213 = vld [vmem:[#allocation2] sm:$0xff]
        %v1214 = vld [vmem:[#allocation2 + $0x8] sm:$0xff]
        %1216 = vset.pattern.permute.xlu0 0
        %1217 = vperm.xlu0 %1216, %v274
        %v1218 = vpop.permute.xlu0 %1217
        %1221 = vset.pattern.permute.xlu0 0
        %1222 = vperm.xlu0 %1221, %v275
        %v1223 = vpop.permute.xlu0 %1222
        %v1225 = vmul.f32 %v1213, %v1218
        %v1226 = vmul.f32 %v1214, %v1223
        %1227 = vst.msk [vmem:[%s258] sm:$0xff] %vm288, %v1225
        %1228 = vst.msk [vmem:[%s258 + $0x8] sm:$0xff] %vm288, %v1226
        %s1229 = sand.u32 %s148, 1
        %s1230 = scalar_lea.sflag [#allocation5], %s1229
        %s1231 = sand.u32 %s148, 1
        %s1232 = smul.addr %s1231, 16
        %s1233 = scalar_lea.vmem [#allocation6], %s1232
        // Predicated region
        $region45: #{tpu_custom_call.1} parent=39 // pred_check
          %p1234 = pneg %p158
        $region46: #{tpu_custom_call.1} parent=39 // pred_check_branch
          %1236 = sbr.rel (%p1234) target = $region48
        $region47: #{tpu_custom_call.1} parent=39 // pred_region
          %s1238 = ssub.s32 256, 256
          %1239 = vsyncadd %s1230, %s1238
          %s1240 = smul.addr %s20, 2
          %s1241 = smul.addr %s1240, 128
          %s1242 = scalar_lea.hbm %s5, %s1241
          %s1243 = sshll.u32 %s1233, 4
          %s1244 = int_to_ptr.vmem [resolvable:$true] %s1243
          %1249 = dma.vmem_to_hbm [thread:$0]  %s1244, 256, %s1242, %s1230, 128, 128, 8
        $region48: #{tpu_custom_call.1} parent=39 // pred_fallthru
          _
      $region40: #{tpu_custom_call.1} parent=5 // pred_fallthru
        _
      %p1250 = scmp.le.s32.totalorder 2, %s15
      // Predicated region
      $region49: #{tpu_custom_call.1} parent=5 // pred_check
        %p1251 = pneg %p1250
      $region50: #{tpu_custom_call.1} parent=5 // pred_check_branch
        %1253 = sbr.rel (%p1251) target = $region52
      $region51: #{tpu_custom_call.1} parent=5 // pred_region
        %s1254 = ssub.s32 %s15, 2
        // Predicated region
        $region53: #{tpu_custom_call.1} parent=51 // pred_check
          %p1255 = pneg %p164
        $region54: #{tpu_custom_call.1} parent=51 // pred_check_branch
          %1257 = sbr.rel (%p1255) target = $region56
        $region55: #{tpu_custom_call.1} parent=51 // pred_region
          %s1258 = sand.u32 %s149, 1
          %s1259 = scalar_lea.sflag [#allocation5], %s1258
          %s1260 = sand.u32 %s149, 1
          %s1261 = smul.addr %s1260, 16
          %s1262 = scalar_lea.vmem [#allocation6], %s1261
          %1263 = dma.done %s1259, 256
        $region56: #{tpu_custom_call.1} parent=51 // pred_fallthru
          _
      $region52: #{tpu_custom_call.1} parent=5 // pred_fallthru
        _
    $region6: #{tpu_custom_call.1} parent=1 // loop_footer
      %s19 = sadd.s32 1, %s15
    $region7: #{tpu_custom_call.1} parent=1 // loop_footer_branch
      %14 = sbr.rel target = $region3
    $region8: #{tpu_custom_call.1} parent=1 // loop_exit
      _
    %1264 = vsyncpa [#allocation4], 1
    %s1265 = scalar_lea.sflag [#allocation4], 1
    %1266 = vsyncpa %s1265, 1
    %1267 = vsyncpa [#allocation5], 1
    %s1268 = scalar_lea.sflag [#allocation5], 1
    %1269 = vsyncpa %s1268, 1

</llo_original>
